<compile_context>
chip_gen: v5e
topology: v5e:2x2
jax: 0.10.0
libtpu: 0.0.40
codegen_flags: <defaults>
</compile_context>

<pallas_src>
import math

import jax
import jax.numpy as jnp
from jax import lax
from jax.experimental import pallas as pl
from jax.experimental.pallas import tpu as pltpu


def _ceil_to(x, m):
    return ((x + m - 1) // m) * m


def _bytes(shape, dtype):
    return math.prod(shape) * jnp.dtype(dtype).itemsize


def _vmem_limit(nbytes):
    # 2x slack for (8,128)/(16,128) tile padding + fixed headroom.
    return int(max(16 << 20, min(120 << 20, 2 * nbytes + (8 << 20))))


# ----------------------------------------------------------------------------
# Call 1: LayerNorm + hoisted input projection + both packed LSTMs.
# ----------------------------------------------------------------------------
def lstm_kernel(
    maxlen_ref,                       # SMEM (2,) i32  [max_enc_len, max_dec_len]
    enc_emb_ref,                      # (Te, Bp, E) f32  embedded enc tokens (pre-LN)
    dec_emb_ref,                      # (Td, Bp, E) f32
    enc_valid_ref,                    # (Te, Bp, 1) f32  1.0 where t < length
    dec_valid_ref,                    # (Td, Bp, 1) f32
    ln_g_ref, ln_b_ref,               # (1, E) f32
    w_ih1_ref, w_hh1_ref, b1_ref,     # (E,4H) bf16, (H,4H) bf16, (1,4H) f32 (i,f,o,g)
    w_ih2_ref, w_hh2_ref, b2_ref,
    enc_out_ref,                      # (Te, Bp, H) bf16  LSTM outputs (time-major)
    dec_out_ref,                      # (Td, Bp, H) bf16
    gates_enc_scr,                    # (Te, Bp, 4H) f32 VMEM  precomputed input gates
    gates_dec_scr,                    # (Td, Bp, 4H) f32 VMEM
):
    Te, Bp, E = enc_emb_ref.shape
    H4 = gates_enc_scr.shape[-1]
    H = H4 // 4

    ln_g = ln_g_ref[...]
    ln_b = ln_b_ref[...]

    # Hoisted LayerNorm + input projection: one big MXU matmul per sequence,
    # bf16 operands / f32 accumulation.
    def precompute(emb_ref, w_ih_ref, b_ref, gates_scr):
        T = emb_ref.shape[0]
        x = emb_ref[...].reshape(T * Bp, E)          # layout-preserving (Bp % 8 == 0)
        mu = jnp.mean(x, axis=-1, keepdims=True)
        xc = x - mu
        var = jnp.mean(xc * xc, axis=-1, keepdims=True)
        ln = xc * lax.rsqrt(var + 1e-5) * ln_g + ln_b
        g = jnp.dot(ln.astype(jnp.bfloat16), w_ih_ref[...],
                    preferred_element_type=jnp.float32) + b_ref[...]
        gates_scr[...] = g.reshape(T, Bp, H4)
        # TODO(synk): chunk over T for very long sequences (v7x VMEM budget).

    precompute(enc_emb_ref, w_ih1_ref, b1_ref, gates_enc_scr)
    precompute(dec_emb_ref, w_ih2_ref, b2_ref, gates_dec_scr)

    # Never-visited / padded timesteps must be finite zeros (masked later, but
    # 0 * NaN would still poison the attention output).
    enc_out_ref[...] = jnp.zeros_like(enc_out_ref)
    dec_out_ref[...] = jnp.zeros_like(dec_out_ref)

    # Packed-sequence LSTM.  h/c are carried as fori_loop values (registers),
    # so the serial h -> gates -> h critical chain has no per-step VMEM
    # round-trips; only the recurrent bf16 matmul remains per step.
    def run_lstm(gates_scr, valid_ref, w_hh_ref, out_ref, t_max, h0, c0):
        w_hh = w_hh_ref[...]                         # (H, 4H) bf16

        def step(t, carry):
            h, c = carry
            gates = gates_scr[t] + jnp.dot(h.astype(jnp.bfloat16), w_hh,
                                           preferred_element_type=jnp.float32)
            # gate order i, f, o, g -> one sigmoid over 3H lanes + one tanh
            sg = jax.nn.sigmoid(gates[:, : 3 * H])
            i_g = sg[:, 0 * H:1 * H]
            f_g = sg[:, 1 * H:2 * H]
            o_g = sg[:, 2 * H:3 * H]
            g_g = jnp.tanh(gates[:, 3 * H:])
            c_new = f_g * c + i_g * g_g
            h_new = o_g * jnp.tanh(c_new)
            valid = valid_ref[t]                     # (Bp, 1) in {0.0, 1.0}
            out_ref[t] = (valid * h_new).astype(out_ref.dtype)
            # freeze state past each row's true length (packed semantics)
            return (h + valid * (h_new - h), c + valid * (c_new - c))

        return lax.fori_loop(0, t_max, step, (h0, c0))

    zeros = jnp.zeros((Bp, H), jnp.float32)
    # lstm_1 over the encoder; final (h, c) is the packed `memory`.
    h1, c1 = run_lstm(gates_enc_scr, enc_valid_ref, w_hh1_ref, enc_out_ref,
                      maxlen_ref[0], zeros, zeros)
    # lstm_2 over the decoder, initialised with memory.
    run_lstm(gates_dec_scr, dec_valid_ref, w_hh2_ref, dec_out_ref,
             maxlen_ref[1], h1, c1)


# ----------------------------------------------------------------------------
# Call 2: scaled-dot-product attention over padded encoder keys + residual.
# ----------------------------------------------------------------------------
def attention_kernel(enc_o_ref, dec_o_ref, attn_bias_ref,
                     wq_ref, bq_ref, wk_ref, bk_ref, wv_ref, bv_ref,
                     out_ref):
    Bp, Te, H = enc_o_ref.shape
    Td = dec_o_ref.shape[1]
    E = wq_ref.shape[1]

    enc2d = enc_o_ref[...].reshape(Bp * Te, H)       # bf16, layout-preserving
    dec2d = dec_o_ref[...].reshape(Bp * Td, H)

    q = (jnp.dot(dec2d, wq_ref[...], preferred_element_type=jnp.float32)
         + bq_ref[...]).reshape(Bp, Td, E)           # 1/sqrt(E) pre-folded
    k = (jnp.dot(enc2d, wk_ref[...], preferred_element_type=jnp.float32)
         + bk_ref[...]).reshape(Bp, Te, E)
    v = (jnp.dot(enc2d, wv_ref[...], preferred_element_type=jnp.float32)
         + bv_ref[...]).reshape(Bp, Te, E)

    scores = jnp.einsum('bte,bse->bts', q.astype(jnp.bfloat16),
                        k.astype(jnp.bfloat16),
                        preferred_element_type=jnp.float32)
    scores = scores + attn_bias_ref[...]             # finite -1e30 pad-key mask
    m = jnp.max(scores, axis=-1, keepdims=True)
    e = jnp.exp(scores - m)
    denom = jnp.sum(e, axis=-1, keepdims=True)
    # approx reciprocal runs on the EUP slot; softmax rows sum to 1 +/- ~1e-3.
    p = e * pl.reciprocal(denom, approx=True)
    attn = jnp.einsum('bts,bse->bte', p.astype(jnp.bfloat16),
                      v.astype(jnp.bfloat16),
                      preferred_element_type=jnp.float32)

    final = dec_o_ref[...].astype(jnp.float32) + attn        # residual (E == H)
    out_ref[...] = final.reshape(Bp * Td, H).astype(out_ref.dtype)


# ----------------------------------------------------------------------------
# Call 3: tied output projection, tiled over (rows, vocab) grid.
# ----------------------------------------------------------------------------
def projection_kernel(x_ref, w_ref, b_ref, o_ref):
    o_ref[...] = (jnp.dot(x_ref[...], w_ref[...],
                          preferred_element_type=jnp.float32) + b_ref[...])


# ----------------------------------------------------------------------------
# Wrapper: embedding gather, padding, gate reorder, scale folding, 3 calls.
# ----------------------------------------------------------------------------
def mynet_forward(enc_tok, dec_tok, params):
    B, Te = enc_tok.shape
    _, Td = dec_tok.shape
    emb = params['emb']                        # (V, E), row 0 (pad) is zero
    V, E = emb.shape
    H = params['w_hh1'].shape[0]
    assert E == H, "weight tying / residual add requires emb_dim == hidden_size"

    f32, bf16 = jnp.float32, jnp.bfloat16
    Bp = max(8, _ceil_to(B, 8))                # sublane-aligned batch
    Te_p = _ceil_to(Te, 8)                     # sublane-aligned time (keeps all
    Td_p = _ceil_to(Td, 8)                     # in-kernel reshapes layout-preserving)

    # true (non-pad) lengths; padded batch rows get length 0
    enc_len = (Te - jnp.sum(enc_tok == 0, axis=-1)).astype(jnp.int32)
    dec_len = (Td - jnp.sum(dec_tok == 0, axis=-1)).astype(jnp.int32)
    enc_len_p = jnp.zeros((Bp,), jnp.int32).at[:B].set(enc_len)
    dec_len_p = jnp.zeros((Bp,), jnp.int32).at[:B].set(dec_len)
    max_lens = jnp.stack([jnp.max(enc_len_p), jnp.max(dec_len_p)]).astype(jnp.int32)

    # embedding gather, batch+time pad, time-major layout (wrapper plumbing)
    def embed(tok, Tp):
        x = jnp.take(emb, tok, axis=0)                        # (B, T, E)
        x = jnp.pad(x, ((0, Bp - B), (0, Tp - tok.shape[1]), (0, 0)))
        return jnp.transpose(x, (1, 0, 2)).astype(f32)        # (Tp, Bp, E)

    enc_emb = embed(enc_tok, Te_p)
    dec_emb = embed(dec_tok, Td_p)

    enc_valid = (jnp.arange(Te_p)[:, None] < enc_len_p[None, :]).astype(f32)[..., None]
    dec_valid = (jnp.arange(Td_p)[:, None] < dec_len_p[None, :]).astype(f32)[..., None]

    key_valid = jnp.arange(Te_p)[None, :] < enc_len_p[:, None]       # (Bp, Te_p)
    attn_bias = jnp.where(key_valid, 0.0, -1e30).astype(f32)[:, None, :]

    # reorder LSTM gates i,f,g,o -> i,f,o,g; matmul weights to bf16
    def reorder(w):
        i, f, g, o = jnp.split(w, 4, axis=-1)
        return jnp.concatenate([i, f, o, g], axis=-1)

    w_ih1 = reorder(params['w_ih1']).astype(bf16)
    w_hh1 = reorder(params['w_hh1']).astype(bf16)
    b1 = reorder(params['b1']).astype(f32)
    w_ih2 = reorder(params['w_ih2']).astype(bf16)
    w_hh2 = reorder(params['w_hh2']).astype(bf16)
    b2 = reorder(params['b2']).astype(f32)

    # fold 1/sqrt(E) softmax scale into the query projection
    inv_scale = 1.0 / (float(E) ** 0.5)
    wq = (params['wq'] * inv_scale).astype(bf16)
    bq = (params['bq'] * inv_scale).astype(f32)
    wk, bk = params['wk'].astype(bf16), params['bk'].astype(f32)
    wv, bv = params['wv'].astype(bf16), params['bv'].astype(f32)

    smem = pl.BlockSpec(memory_space=pltpu.MemorySpace.SMEM)
    vmem = pl.BlockSpec(memory_space=pltpu.MemorySpace.VMEM)

    # ------------------ call 1: LN + gate precompute + both LSTMs -----------
    lstm_inputs = (max_lens, enc_emb, dec_emb, enc_valid, dec_valid,
                   params['ln_g'].astype(f32), params['ln_b'].astype(f32),
                   w_ih1, w_hh1, b1, w_ih2, w_hh2, b2)
    lstm_out_shapes = (jax.ShapeDtypeStruct((Te_p, Bp, H), bf16),
                       jax.ShapeDtypeStruct((Td_p, Bp, H), bf16))
    fp1 = (sum(_bytes(a.shape, a.dtype) for a in lstm_inputs[1:])
           + sum(_bytes(s.shape, s.dtype) for s in lstm_out_shapes)
           + _bytes((Te_p, Bp, 4 * H), f32) + _bytes((Td_p, Bp, 4 * H), f32))
    enc_o_tm, dec_o_tm = pl.pallas_call(
        lstm_kernel,
        out_shape=lstm_out_shapes,
        in_specs=[smem] + [vmem] * (len(lstm_inputs) - 1),
        out_specs=(vmem, vmem),
        scratch_shapes=[pltpu.VMEM((Te_p, Bp, 4 * H), f32),
                        pltpu.VMEM((Td_p, Bp, 4 * H), f32)],
        compiler_params=pltpu.CompilerParams(vmem_limit_bytes=_vmem_limit(fp1)),
    )(*lstm_inputs)

    # time-major -> batch-major: layout plumbing done by XLA, not in-kernel
    enc_o = jnp.transpose(enc_o_tm, (1, 0, 2))        # (Bp, Te_p, H) bf16
    dec_o = jnp.transpose(dec_o_tm, (1, 0, 2))        # (Bp, Td_p, H) bf16

    # ------------------ call 2: attention + residual ------------------------
    rows = Bp * Td_p
    attn_inputs = (enc_o, dec_o, attn_bias, wq, bq, wk, bk, wv, bv)
    fp2 = (sum(_bytes(a.shape, a.dtype) for a in attn_inputs)
           + _bytes((rows, H), bf16) + 3 * _bytes((Bp, Td_p, Te_p), f32))
    final_in = pl.pallas_call(
        attention_kernel,
        out_shape=jax.ShapeDtypeStruct((rows, H), bf16),
        in_specs=[vmem] * len(attn_inputs),
        out_specs=vmem,
        compiler_params=pltpu.CompilerParams(vmem_limit_bytes=_vmem_limit(fp2)),
    )(*attn_inputs)

    # ------------------ call 3: tied projection, vocab-tiled ----------------
    Vp128 = _ceil_to(V, 128)
    TV = min(512, Vp128)                       # lane-dense vocab tile
    Vp = _ceil_to(Vp128, TV)
    RT = rows if rows <= 512 else 512          # row tile (rows is a multiple of 8)
    rows_p = _ceil_to(rows, RT)
    if rows_p != rows:
        final_in = jnp.pad(final_in, ((0, rows_p - rows), (0, 0)))

    wout = jnp.pad(params['wout'], ((0, 0), (0, Vp - V))).astype(bf16)
    bout = jnp.pad(params['bout'], ((0, 0), (0, Vp - V))).astype(f32)

    blk = 2 * (_bytes((RT, H), bf16) + _bytes((H, TV), bf16)
               + _bytes((1, TV), f32) + _bytes((RT, TV), f32))
    logits = pl.pallas_call(
        projection_kernel,
        out_shape=jax.ShapeDtypeStruct((rows_p, Vp), f32),
        grid=(rows_p // RT, Vp // TV),
        in_specs=[pl.BlockSpec((RT, H), lambda i, j: (i, 0)),
                  pl.BlockSpec((H, TV), lambda i, j: (0, j)),
                  pl.BlockSpec((1, TV), lambda i, j: (0, j))],
        out_specs=pl.BlockSpec((RT, TV), lambda i, j: (i, j)),
        compiler_params=pltpu.CompilerParams(
            dimension_semantics=("parallel", "parallel"),
            vmem_limit_bytes=_vmem_limit(blk)),
    )(final_in, wout, bout)

    logits = logits[:rows].reshape(Bp, Td_p, Vp)
    return logits[:B, :Td, :V]


# ----------------------------------------------------------------------------
# Pure-JAX reference (f32, PyTorch gate order) for a sanity check.
# ----------------------------------------------------------------------------
def reference_forward(enc_tok, dec_tok, p):
    emb = p['emb']
    H = p['w_hh1'].shape[0]
    E = emb.shape[1]

    def embed_ln(tok):
        x = emb[tok]
        mu = jnp.mean(x, -1, keepdims=True)
        xc = x - mu
        var = jnp.mean(xc * xc, -1, keepdims=True)
        return xc * lax.rsqrt(var + 1e-5) * p['ln_g'][0] + p['ln_b'][0]

    def lstm(x, lens, w_ih, w_hh, b, h0, c0):
        T = x.shape[1]

        def step(carry, inp):
            h, c = carry
            x_t, t = inp
            gates = x_t @ w_ih + h @ w_hh + b[0]
            i = jax.nn.sigmoid(gates[:, :H]); f = jax.nn.sigmoid(gates[:, H:2 * H])
            g = jnp.tanh(gates[:, 2 * H:3 * H]); o = jax.nn.sigmoid(gates[:, 3 * H:])
            c_new = f * c + i * g
            h_new = o * jnp.tanh(c_new)
            valid = (lens > t)[:, None]
            h = jnp.where(valid, h_new, h)
            c = jnp.where(valid, c_new, c)
            return (h, c), jnp.where(valid, h_new, 0.0)

        (h, c), outs = lax.scan(step, (h0, c0),
                                (jnp.transpose(x, (1, 0, 2)), jnp.arange(T)))
        return jnp.transpose(outs, (1, 0, 2)), h, c

    B, Te = enc_tok.shape
    Td = dec_tok.shape[1]
    enc_len = Te - jnp.sum(enc_tok == 0, axis=-1)
    dec_len = Td - jnp.sum(dec_tok == 0, axis=-1)
    z = jnp.zeros((B, H), jnp.float32)
    enc_o, h1, c1 = lstm(embed_ln(enc_tok), enc_len, p['w_ih1'], p['w_hh1'], p['b1'], z, z)
    dec_o, _, _ = lstm(embed_ln(dec_tok), dec_len, p['w_ih2'], p['w_hh2'], p['b2'], h1, c1)

    q = dec_o @ p['wq'] + p['bq'][0]
    k = enc_o @ p['wk'] + p['bk'][0]
    v = enc_o @ p['wv'] + p['bv'][0]
    scores = jnp.einsum('bte,bse->bts', q, k)
    mask = jnp.arange(Te)[None, None, :] >= enc_len[:, None, None]
    scores = jnp.where(mask, -jnp.inf, scores) / (E ** 0.5)
    pw = jax.nn.softmax(scores, axis=-1)
    attn = jnp.einsum('bts,bse->bte', pw, v)
    return (dec_o + attn) @ p['wout'] + p['bout'][0]


# ----------------------------------------------------------------------------
if __name__ == "__main__":
    B, Te, Td = 2, 8, 6
    E = H = 32          # emb_dim == hidden_size -> weight tying active
    V = 48

    key = jax.random.PRNGKey(0)
    ks = jax.random.split(key, 16)

    def unif(k, shape, s=0.1):
        return jax.random.uniform(k, shape, jnp.float32, -s, s)

    emb = unif(ks[0], (V, E)).at[0].set(0.0)   # padding_idx=0 row zeroed
    params = {
        'emb': emb,
        'ln_g': jnp.ones((1, E), jnp.float32),
        'ln_b': jnp.zeros((1, E), jnp.float32),
        'w_ih1': unif(ks[1], (E, 4 * H)), 'w_hh1': unif(ks[2], (H, 4 * H)),
        'b1': unif(ks[3], (1, 4 * H)),     # b_ih + b_hh folded together
        'w_ih2': unif(ks[4], (E, 4 * H)), 'w_hh2': unif(ks[5], (H, 4 * H)),
        'b2': unif(ks[6], (1, 4 * H)),
        'wq': unif(ks[7], (E, E)), 'bq': unif(ks[8], (1, E)),
        'wk': unif(ks[9], (E, E)), 'bk': unif(ks[10], (1, E)),
        'wv': unif(ks[11], (E, E)), 'bv': unif(ks[12], (1, E)),
        'wout': emb.T,                      # weight tying: final weight = embedding
        'bout': unif(ks[13], (1, V)),
    }

    # Token ids with trailing padding (id 0), consistent with pack_padded_sequence.
    enc_tok = jax.random.randint(ks[14], (B, Te), 1, V)
    dec_tok = jax.random.randint(ks[15], (B, Td), 1, V)
    enc_tok = jnp.where(jnp.arange(Te)[None, :] < jnp.array([[8], [5]]), enc_tok, 0)
    dec_tok = jnp.where(jnp.arange(Td)[None, :] < jnp.array([[6], [4]]), dec_tok, 0)
    enc_tok = enc_tok.astype(jnp.int32)
    dec_tok = dec_tok.astype(jnp.int32)

    out = jax.block_until_ready(mynet_forward(enc_tok, dec_tok, params))
    ref = jax.block_until_ready(reference_forward(enc_tok, dec_tok, params))

    assert out.shape == (B, Td, V)
    assert bool(jnp.all(jnp.isfinite(out)))
    # bf16 MXU operands / approx reciprocal vs. the f32 reference: slightly
    # wider tolerance than pure-f32 (errors measured well below 1e-2 here).
    assert bool(jnp.allclose(out, ref, atol=2e-2, rtol=2e-2))
    print("KERNEL_OK")
</pallas_src>

<mosaic_0001>
module attributes {stable_mosaic.version = 11 : i64} {
  func.func @lstm_kernel(%arg0: memref<2xi32, #tpu.memory_space<smem>>, %arg1: memref<8x8x32xf32, #tpu.memory_space<vmem>>, %arg2: memref<8x8x32xf32, #tpu.memory_space<vmem>>, %arg3: memref<8x8x1xf32, #tpu.memory_space<vmem>>, %arg4: memref<8x8x1xf32, #tpu.memory_space<vmem>>, %arg5: memref<1x32xf32, #tpu.memory_space<vmem>>, %arg6: memref<1x32xf32, #tpu.memory_space<vmem>>, %arg7: memref<32x128xbf16, #tpu.memory_space<vmem>>, %arg8: memref<32x128xbf16, #tpu.memory_space<vmem>>, %arg9: memref<1x128xf32, #tpu.memory_space<vmem>>, %arg10: memref<32x128xbf16, #tpu.memory_space<vmem>>, %arg11: memref<32x128xbf16, #tpu.memory_space<vmem>>, %arg12: memref<1x128xf32, #tpu.memory_space<vmem>>, %arg13: memref<8x8x32xbf16, #tpu.memory_space<vmem>>, %arg14: memref<8x8x32xbf16, #tpu.memory_space<vmem>>, %arg15: memref<8x8x128xf32, #tpu.memory_space<vmem>>, %arg16: memref<8x8x128xf32, #tpu.memory_space<vmem>>) attributes {dimension_semantics = [], scalar_prefetch = 0 : i64, scratch_operands = 2 : i64, tpu.core_type = #tpu.core_type<tc>} {
    %c0 = arith.constant 0 : index
    %c0_0 = arith.constant 0 : index
    %0 = vector.load %arg5[%c0, %c0_0] : memref<1x32xf32, #tpu.memory_space<vmem>>, vector<1x32xf32>
    %c0_1 = arith.constant 0 : index
    %c0_2 = arith.constant 0 : index
    %1 = vector.load %arg6[%c0_1, %c0_2] : memref<1x32xf32, #tpu.memory_space<vmem>>, vector<1x32xf32>
    %c0_3 = arith.constant 0 : index
    %c0_4 = arith.constant 0 : index
    %c0_5 = arith.constant 0 : index
    %2 = vector.load %arg1[%c0_3, %c0_4, %c0_5] : memref<8x8x32xf32, #tpu.memory_space<vmem>>, vector<8x8x32xf32>
    %3 = vector.shape_cast %2 : vector<8x8x32xf32> to vector<64x32xf32>
    %cst = arith.constant dense<0.000000e+00> : vector<64xf32>
    %4 = vector.multi_reduction <add>, %3, %cst [1] : vector<64x32xf32> to vector<64xf32>
    %5 = vector.shape_cast %4 : vector<64xf32> to vector<64x1xf32>
    %cst_6 = arith.constant 3.200000e+01 : f32
    %6 = vector.broadcast %cst_6 : f32 to vector<64x1xf32>
    %7 = arith.divf %5, %6 : vector<64x1xf32>
    %8 = vector.broadcast %7 : vector<64x1xf32> to vector<64x32xf32>
    %9 = arith.subf %3, %8 : vector<64x32xf32>
    %10 = arith.mulf %9, %9 : vector<64x32xf32>
    %cst_7 = arith.constant dense<0.000000e+00> : vector<64xf32>
    %11 = vector.multi_reduction <add>, %10, %cst_7 [1] : vector<64x32xf32> to vector<64xf32>
    %12 = vector.shape_cast %11 : vector<64xf32> to vector<64x1xf32>
    %cst_8 = arith.constant 3.200000e+01 : f32
    %13 = vector.broadcast %cst_8 : f32 to vector<64x1xf32>
    %14 = arith.divf %12, %13 : vector<64x1xf32>
    %cst_9 = arith.constant 9.99999974E-6 : f32
    %15 = vector.broadcast %cst_9 : f32 to vector<64x1xf32>
    %16 = arith.addf %14, %15 : vector<64x1xf32>
    %17 = math.rsqrt %16 : vector<64x1xf32>
    %18 = vector.broadcast %17 : vector<64x1xf32> to vector<64x32xf32>
    %19 = arith.mulf %9, %18 : vector<64x32xf32>
    %20 = vector.broadcast %0 : vector<1x32xf32> to vector<64x32xf32>
    %21 = arith.mulf %19, %20 : vector<64x32xf32>
    %22 = vector.broadcast %1 : vector<1x32xf32> to vector<64x32xf32>
    %23 = arith.addf %21, %22 : vector<64x32xf32>
    %24 = arith.truncf %23 : vector<64x32xf32> to vector<64x32xbf16>
    %c0_10 = arith.constant 0 : index
    %c0_11 = arith.constant 0 : index
    %25 = vector.load %arg7[%c0_10, %c0_11] : memref<32x128xbf16, #tpu.memory_space<vmem>>, vector<32x128xbf16>
    %cst_12 = arith.constant dense<0.000000e+00> : vector<64x128xf32>
    %26 = tpu.matmul %24, %25, %cst_12 {dimension_numbers = #tpu.dot_dimension_numbers<[1], [0], [0], [1], [0, 0, 1, 1], [], []>} : vector<64x32xbf16>, vector<32x128xbf16>, vector<64x128xf32> -> vector<64x128xf32>
    %c0_13 = arith.constant 0 : index
    %c0_14 = arith.constant 0 : index
    %27 = vector.load %arg9[%c0_13, %c0_14] : memref<1x128xf32, #tpu.memory_space<vmem>>, vector<1x128xf32>
    %28 = vector.broadcast %27 : vector<1x128xf32> to vector<64x128xf32>
    %29 = arith.addf %26, %28 : vector<64x128xf32>
    %30 = vector.shape_cast %29 : vector<64x128xf32> to vector<8x8x128xf32>
    %c0_15 = arith.constant 0 : index
    %c0_16 = arith.constant 0 : index
    %c0_17 = arith.constant 0 : index
    %31 = vector.load %arg15[%c0_15, %c0_16, %c0_17] : memref<8x8x128xf32, #tpu.memory_space<vmem>>, vector<8x8x128xf32>
    tpu.vector_store %arg15[%c0_15, %c0_16, %c0_17], %30 {strides = array<i32>} : memref<8x8x128xf32, #tpu.memory_space<vmem>>, vector<8x8x128xf32>,
    %c0_18 = arith.constant 0 : index
    %c0_19 = arith.constant 0 : index
    %c0_20 = arith.constant 0 : index
    %32 = vector.load %arg2[%c0_18, %c0_19, %c0_20] : memref<8x8x32xf32, #tpu.memory_space<vmem>>, vector<8x8x32xf32>
    %33 = vector.shape_cast %32 : vector<8x8x32xf32> to vector<64x32xf32>
    %cst_21 = arith.constant dense<0.000000e+00> : vector<64xf32>
    %34 = vector.multi_reduction <add>, %33, %cst_21 [1] : vector<64x32xf32> to vector<64xf32>
    %35 = vector.shape_cast %34 : vector<64xf32> to vector<64x1xf32>
    %cst_22 = arith.constant 3.200000e+01 : f32
    %36 = vector.broadcast %cst_22 : f32 to vector<64x1xf32>
    %37 = arith.divf %35, %36 : vector<64x1xf32>
    %38 = vector.broadcast %37 : vector<64x1xf32> to vector<64x32xf32>
    %39 = arith.subf %33, %38 : vector<64x32xf32>
    %40 = arith.mulf %39, %39 : vector<64x32xf32>
    %cst_23 = arith.constant dense<0.000000e+00> : vector<64xf32>
    %41 = vector.multi_reduction <add>, %40, %cst_23 [1] : vector<64x32xf32> to vector<64xf32>
    %42 = vector.shape_cast %41 : vector<64xf32> to vector<64x1xf32>
    %cst_24 = arith.constant 3.200000e+01 : f32
    %43 = vector.broadcast %cst_24 : f32 to vector<64x1xf32>
    %44 = arith.divf %42, %43 : vector<64x1xf32>
    %cst_25 = arith.constant 9.99999974E-6 : f32
    %45 = vector.broadcast %cst_25 : f32 to vector<64x1xf32>
    %46 = arith.addf %44, %45 : vector<64x1xf32>
    %47 = math.rsqrt %46 : vector<64x1xf32>
    %48 = vector.broadcast %47 : vector<64x1xf32> to vector<64x32xf32>
    %49 = arith.mulf %39, %48 : vector<64x32xf32>
    %50 = vector.broadcast %0 : vector<1x32xf32> to vector<64x32xf32>
    %51 = arith.mulf %49, %50 : vector<64x32xf32>
    %52 = vector.broadcast %1 : vector<1x32xf32> to vector<64x32xf32>
    %53 = arith.addf %51, %52 : vector<64x32xf32>
    %54 = arith.truncf %53 : vector<64x32xf32> to vector<64x32xbf16>
    %c0_26 = arith.constant 0 : index
    %c0_27 = arith.constant 0 : index
    %55 = vector.load %arg10[%c0_26, %c0_27] : memref<32x128xbf16, #tpu.memory_space<vmem>>, vector<32x128xbf16>
    %cst_28 = arith.constant dense<0.000000e+00> : vector<64x128xf32>
    %56 = tpu.matmul %54, %55, %cst_28 {dimension_numbers = #tpu.dot_dimension_numbers<[1], [0], [0], [1], [0, 0, 1, 1], [], []>} : vector<64x32xbf16>, vector<32x128xbf16>, vector<64x128xf32> -> vector<64x128xf32>
    %c0_29 = arith.constant 0 : index
    %c0_30 = arith.constant 0 : index
    %57 = vector.load %arg12[%c0_29, %c0_30] : memref<1x128xf32, #tpu.memory_space<vmem>>, vector<1x128xf32>
    %58 = vector.broadcast %57 : vector<1x128xf32> to vector<64x128xf32>
    %59 = arith.addf %56, %58 : vector<64x128xf32>
    %60 = vector.shape_cast %59 : vector<64x128xf32> to vector<8x8x128xf32>
    %c0_31 = arith.constant 0 : index
    %c0_32 = arith.constant 0 : index
    %c0_33 = arith.constant 0 : index
    %61 = vector.load %arg16[%c0_31, %c0_32, %c0_33] : memref<8x8x128xf32, #tpu.memory_space<vmem>>, vector<8x8x128xf32>
    tpu.vector_store %arg16[%c0_31, %c0_32, %c0_33], %60 {strides = array<i32>} : memref<8x8x128xf32, #tpu.memory_space<vmem>>, vector<8x8x128xf32>,
    %cst_34 = arith.constant 0.000000e+00 : bf16
    %62 = vector.broadcast %cst_34 : bf16 to vector<8x8x32xbf16>
    %c0_35 = arith.constant 0 : index
    %c0_36 = arith.constant 0 : index
    %c0_37 = arith.constant 0 : index
    %63 = vector.load %arg13[%c0_35, %c0_36, %c0_37] : memref<8x8x32xbf16, #tpu.memory_space<vmem>>, vector<8x8x32xbf16>
    tpu.vector_store %arg13[%c0_35, %c0_36, %c0_37], %62 {strides = array<i32>} : memref<8x8x32xbf16, #tpu.memory_space<vmem>>, vector<8x8x32xbf16>,
    %cst_38 = arith.constant 0.000000e+00 : bf16
    %64 = vector.broadcast %cst_38 : bf16 to vector<8x8x32xbf16>
    %c0_39 = arith.constant 0 : index
    %c0_40 = arith.constant 0 : index
    %c0_41 = arith.constant 0 : index
    %65 = vector.load %arg14[%c0_39, %c0_40, %c0_41] : memref<8x8x32xbf16, #tpu.memory_space<vmem>>, vector<8x8x32xbf16>
    tpu.vector_store %arg14[%c0_39, %c0_40, %c0_41], %64 {strides = array<i32>} : memref<8x8x32xbf16, #tpu.memory_space<vmem>>, vector<8x8x32xbf16>,
    %cst_42 = arith.constant 0.000000e+00 : f32
    %66 = vector.broadcast %cst_42 : f32 to vector<8x32xf32>
    %c0_43 = arith.constant 0 : index
    %67 = memref.load %arg0[%c0_43] : memref<2xi32, #tpu.memory_space<smem>>
    %c0_44 = arith.constant 0 : index
    %c0_45 = arith.constant 0 : index
    %68 = vector.load %arg8[%c0_44, %c0_45] : memref<32x128xbf16, #tpu.memory_space<vmem>>, vector<32x128xbf16>
    %c0_i32 = arith.constant 0 : i32
    %69 = arith.subi %67, %c0_i32 : i32
    %70 = arith.addi %c0_i32, %69 : i32
    %c1_i32 = arith.constant 1 : i32
    %71:2 = scf.for %arg17 = %c0_i32 to %70 step %c1_i32 iter_args(%arg18 = %66, %arg19 = %66) -> (vector<8x32xf32>, vector<8x32xf32>)  : i32 {
      %77 = arith.index_cast %arg17 : i32 to index
      %c0_50 = arith.constant 0 : index
      %c0_51 = arith.constant 0 : index
      %78 = vector.load %arg15[%77, %c0_50, %c0_51] : memref<8x8x128xf32, #tpu.memory_space<vmem>>, vector<1x8x128xf32>
      %79 = vector.shape_cast %78 : vector<1x8x128xf32> to vector<8x128xf32>
      %80 = arith.truncf %arg18 : vector<8x32xf32> to vector<8x32xbf16>
      %cst_52 = arith.constant dense<0.000000e+00> : vector<8x128xf32>
      %81 = tpu.matmul %80, %68, %cst_52 {dimension_numbers = #tpu.dot_dimension_numbers<[1], [0], [0], [1], [0, 0, 1, 1], [], []>} : vector<8x32xbf16>, vector<32x128xbf16>, vector<8x128xf32> -> vector<8x128xf32>
      %82 = arith.addf %79, %81 : vector<8x128xf32>
      %83 = vector.extract_strided_slice %82 {offsets = [0, 0], sizes = [8, 96], strides = [1, 1]} : vector<8x128xf32> to vector<8x96xf32>
      %84 = arith.negf %83 : vector<8x96xf32>
      %85 = math.exp %84 : vector<8x96xf32>
      %cst_53 = arith.constant 1.000000e+00 : f32
      %86 = vector.broadcast %cst_53 : f32 to vector<8x96xf32>
      %87 = arith.addf %86, %85 : vector<8x96xf32>
      %88 = arith.divf %86, %87 : vector<8x96xf32>
      %89 = vector.extract_strided_slice %88 {offsets = [0, 0], sizes = [8, 32], strides = [1, 1]} : vector<8x96xf32> to vector<8x32xf32>
      %90 = vector.extract_strided_slice %88 {offsets = [0, 32], sizes = [8, 32], strides = [1, 1]} : vector<8x96xf32> to vector<8x32xf32>
      %91 = vector.extract_strided_slice %88 {offsets = [0, 64], sizes = [8, 32], strides = [1, 1]} : vector<8x96xf32> to vector<8x32xf32>
      %92 = vector.extract_strided_slice %82 {offsets = [0, 96], sizes = [8, 32], strides = [1, 1]} : vector<8x128xf32> to vector<8x32xf32>
      %93 = math.tanh %92 : vector<8x32xf32>
      %94 = arith.mulf %90, %arg19 : vector<8x32xf32>
      %95 = arith.mulf %89, %93 : vector<8x32xf32>
      %96 = arith.addf %94, %95 : vector<8x32xf32>
      %97 = math.tanh %96 : vector<8x32xf32>
      %98 = arith.mulf %91, %97 : vector<8x32xf32>
      %99 = arith.index_cast %arg17 : i32 to index
      %c0_54 = arith.constant 0 : index
      %c0_55 = arith.constant 0 : index
      %100 = vector.load %arg3[%99, %c0_54, %c0_55] : memref<8x8x1xf32, #tpu.memory_space<vmem>>, vector<1x8x1xf32>
      %101 = vector.shape_cast %100 : vector<1x8x1xf32> to vector<8x1xf32>
      %102 = vector.broadcast %101 : vector<8x1xf32> to vector<8x32xf32>
      %103 = arith.mulf %102, %98 : vector<8x32xf32>
      %104 = arith.truncf %103 : vector<8x32xf32> to vector<8x32xbf16>
      %105 = arith.index_cast %arg17 : i32 to index
      %c0_56 = arith.constant 0 : index
      %c0_57 = arith.constant 0 : index
      %106 = vector.load %arg13[%105, %c0_56, %c0_57] : memref<8x8x32xbf16, #tpu.memory_space<vmem>>, vector<1x8x32xbf16>
      %107 = vector.shape_cast %106 : vector<1x8x32xbf16> to vector<8x32xbf16>
      %108 = vector.shape_cast %104 : vector<8x32xbf16> to vector<1x8x32xbf16>
      tpu.vector_store %arg13[%105, %c0_56, %c0_57], %108 {strides = array<i32>} : memref<8x8x32xbf16, #tpu.memory_space<vmem>>, vector<1x8x32xbf16>,
      %109 = arith.subf %98, %arg18 : vector<8x32xf32>
      %110 = vector.broadcast %101 : vector<8x1xf32> to vector<8x32xf32>
      %111 = arith.mulf %110, %109 : vector<8x32xf32>
      %112 = arith.addf %arg18, %111 : vector<8x32xf32>
      %113 = arith.subf %96, %arg19 : vector<8x32xf32>
      %114 = vector.broadcast %101 : vector<8x1xf32> to vector<8x32xf32>
      %115 = arith.mulf %114, %113 : vector<8x32xf32>
      %116 = arith.addf %arg19, %115 : vector<8x32xf32>
      scf.yield %112, %116 : vector<8x32xf32>, vector<8x32xf32>
    }
    %c1 = arith.constant 1 : index
    %72 = memref.load %arg0[%c1] : memref<2xi32, #tpu.memory_space<smem>>
    %c0_46 = arith.constant 0 : index
    %c0_47 = arith.constant 0 : index
    %73 = vector.load %arg11[%c0_46, %c0_47] : memref<32x128xbf16, #tpu.memory_space<vmem>>, vector<32x128xbf16>
    %c0_i32_48 = arith.constant 0 : i32
    %74 = arith.subi %72, %c0_i32_48 : i32
    %75 = arith.addi %c0_i32_48, %74 : i32
    %c1_i32_49 = arith.constant 1 : i32
    %76:2 = scf.for %arg17 = %c0_i32_48 to %75 step %c1_i32_49 iter_args(%arg18 = %71#0, %arg19 = %71#1) -> (vector<8x32xf32>, vector<8x32xf32>)  : i32 {
      %77 = arith.index_cast %arg17 : i32 to index
      %c0_50 = arith.constant 0 : index
      %c0_51 = arith.constant 0 : index
      %78 = vector.load %arg16[%77, %c0_50, %c0_51] : memref<8x8x128xf32, #tpu.memory_space<vmem>>, vector<1x8x128xf32>
      %79 = vector.shape_cast %78 : vector<1x8x128xf32> to vector<8x128xf32>
      %80 = arith.truncf %arg18 : vector<8x32xf32> to vector<8x32xbf16>
      %cst_52 = arith.constant dense<0.000000e+00> : vector<8x128xf32>
      %81 = tpu.matmul %80, %73, %cst_52 {dimension_numbers = #tpu.dot_dimension_numbers<[1], [0], [0], [1], [0, 0, 1, 1], [], []>} : vector<8x32xbf16>, vector<32x128xbf16>, vector<8x128xf32> -> vector<8x128xf32>
      %82 = arith.addf %79, %81 : vector<8x128xf32>
      %83 = vector.extract_strided_slice %82 {offsets = [0, 0], sizes = [8, 96], strides = [1, 1]} : vector<8x128xf32> to vector<8x96xf32>
      %84 = arith.negf %83 : vector<8x96xf32>
      %85 = math.exp %84 : vector<8x96xf32>
      %cst_53 = arith.constant 1.000000e+00 : f32
      %86 = vector.broadcast %cst_53 : f32 to vector<8x96xf32>
      %87 = arith.addf %86, %85 : vector<8x96xf32>
      %88 = arith.divf %86, %87 : vector<8x96xf32>
      %89 = vector.extract_strided_slice %88 {offsets = [0, 0], sizes = [8, 32], strides = [1, 1]} : vector<8x96xf32> to vector<8x32xf32>
      %90 = vector.extract_strided_slice %88 {offsets = [0, 32], sizes = [8, 32], strides = [1, 1]} : vector<8x96xf32> to vector<8x32xf32>
      %91 = vector.extract_strided_slice %88 {offsets = [0, 64], sizes = [8, 32], strides = [1, 1]} : vector<8x96xf32> to vector<8x32xf32>
      %92 = vector.extract_strided_slice %82 {offsets = [0, 96], sizes = [8, 32], strides = [1, 1]} : vector<8x128xf32> to vector<8x32xf32>
      %93 = math.tanh %92 : vector<8x32xf32>
      %94 = arith.mulf %90, %arg19 : vector<8x32xf32>
      %95 = arith.mulf %89, %93 : vector<8x32xf32>
      %96 = arith.addf %94, %95 : vector<8x32xf32>
      %97 = math.tanh %96 : vector<8x32xf32>
      %98 = arith.mulf %91, %97 : vector<8x32xf32>
      %99 = arith.index_cast %arg17 : i32 to index
      %c0_54 = arith.constant 0 : index
      %c0_55 = arith.constant 0 : index
      %100 = vector.load %arg4[%99, %c0_54, %c0_55] : memref<8x8x1xf32, #tpu.memory_space<vmem>>, vector<1x8x1xf32>
      %101 = vector.shape_cast %100 : vector<1x8x1xf32> to vector<8x1xf32>
      %102 = vector.broadcast %101 : vector<8x1xf32> to vector<8x32xf32>
      %103 = arith.mulf %102, %98 : vector<8x32xf32>
      %104 = arith.truncf %103 : vector<8x32xf32> to vector<8x32xbf16>
      %105 = arith.index_cast %arg17 : i32 to index
      %c0_56 = arith.constant 0 : index
      %c0_57 = arith.constant 0 : index
      %106 = vector.load %arg14[%105, %c0_56, %c0_57] : memref<8x8x32xbf16, #tpu.memory_space<vmem>>, vector<1x8x32xbf16>
      %107 = vector.shape_cast %106 : vector<1x8x32xbf16> to vector<8x32xbf16>
      %108 = vector.shape_cast %104 : vector<8x32xbf16> to vector<1x8x32xbf16>
      tpu.vector_store %arg14[%105, %c0_56, %c0_57], %108 {strides = array<i32>} : memref<8x8x32xbf16, #tpu.memory_space<vmem>>, vector<1x8x32xbf16>,
      %109 = arith.subf %98, %arg18 : vector<8x32xf32>
      %110 = vector.broadcast %101 : vector<8x1xf32> to vector<8x32xf32>
      %111 = arith.mulf %110, %109 : vector<8x32xf32>
      %112 = arith.addf %arg18, %111 : vector<8x32xf32>
      %113 = arith.subf %96, %arg19 : vector<8x32xf32>
      %114 = vector.broadcast %101 : vector<8x1xf32> to vector<8x32xf32>
      %115 = arith.mulf %114, %113 : vector<8x32xf32>
      %116 = arith.addf %arg19, %115 : vector<8x32xf32>
      scf.yield %112, %116 : vector<8x32xf32>, vector<8x32xf32>
    }
    return
  }
}

</mosaic_0001>

<llo_original>
// kernel: tpu_custom_call.1
$region0: #{tpu_custom_call.1}
  #allocation0 [shape = 'u32[]', space=smem, size = 0x4, offset = 0x4, fixed_abs, tag = 'smem constant byte address 0x4 - core index']
  #allocation1 [shape = 'u32[72,128]{1,0:T(1,128)}', space=vmem, size = 0x9000, scoped, tag = 'internal scratch']
  #allocation2 [shape = 'f32[8,8,128]{2,1,0:T(8,128)}', space=vmem, size = 0x8000, scoped, tag = 'scratch operand']
  #allocation3 [shape = 'f32[8,8,128]{2,1,0:T(8,128)}', space=vmem, size = 0x8000, scoped, tag = 'scratch operand']
  %s0 = inlined_call_operand.vmem [shape: s32[2], index: 0, kind: input, shape index: {}]
  %s1 = inlined_call_operand.vmem [shape: f32[8,8,32], index: 1, kind: input, shape index: {}]
  %s2 = inlined_call_operand.vmem [shape: f32[8,8,32], index: 2, kind: input, shape index: {}]
  %s3 = inlined_call_operand.vmem [shape: f32[8,8,1], index: 3, kind: input, shape index: {}]
  %s4 = inlined_call_operand.vmem [shape: f32[8,8,1], index: 4, kind: input, shape index: {}]
  %s5 = inlined_call_operand.hbm [shape: f32[1,32], index: 5, kind: input, shape index: {}]
  %s6 = inlined_call_operand.hbm [shape: f32[1,32], index: 6, kind: input, shape index: {}]
  %s7 = inlined_call_operand.hbm [shape: bf16[32,128], index: 7, kind: input, shape index: {}]
  %s8 = inlined_call_operand.hbm [shape: bf16[32,128], index: 8, kind: input, shape index: {}]
  %s9 = inlined_call_operand.hbm [shape: f32[1,128], index: 9, kind: input, shape index: {}]
  %s10 = inlined_call_operand.vmem [shape: bf16[32,128], index: 10, kind: input, shape index: {}]
  %s11 = inlined_call_operand.hbm [shape: bf16[32,128], index: 11, kind: input, shape index: {}]
  %s12 = inlined_call_operand.vmem [shape: f32[1,128], index: 12, kind: input, shape index: {}]
  %s13 = inlined_call_operand.hbm [shape: bf16[8,8,32], index: 13, kind: output, shape index: {0}]
  %s14 = inlined_call_operand.hbm [shape: bf16[8,8,32], index: 14, kind: output, shape index: {1}]
  %15 = xla_tuple %s13, %s14
  %s16 = sld [smem:[#allocation0]]
  $region112: #{tpu_custom_call.1} parent=0
    _
  %s18 = ssub.s32 1, %s16
  %s19 = scalar_select 0, %s18, %s16
  $region1: #{tpu_custom_call.1} parent=0
    #allocation4 [shape = 'u8[512]{0}', space=smem, size = 0x200, scoped, tag = 'input window, operand 0, single buffered']
    #allocation5 [shape = 's32[1]{0}', space=sflag, size = 0x4, scoped, tag = 'scoped memory for tpu_custom_call.1']
    #allocation6 [shape = 's32[1]{0}', space=sflag, size = 0x4, scoped, tag = 'scoped memory for tpu_custom_call.1']
    #allocation7 [shape = 's32[1]{0}', space=sflag, size = 0x4, scoped, tag = 'scoped memory for tpu_custom_call.1']
    #allocation8 [shape = 'u8[512]{0}', space=vmem, size = 0x400, scoped, tag = 'input window, operand 5, single buffered']
    #allocation9 [shape = 'u8[512]{0}', space=vmem, size = 0x400, scoped, tag = 'input window, operand 6, single buffered']
    #allocation10 [shape = 's32[1]{0}', space=sflag, size = 0x4, scoped, tag = 'scoped memory for tpu_custom_call.1']
    #allocation11 [shape = 'u8[8192]{0}', space=vmem, size = 0x2000, scoped, tag = 'input window, operand 7, single buffered']
    #allocation12 [shape = 'u8[8192]{0}', space=vmem, size = 0x2000, scoped, tag = 'input window, operand 8, single buffered']
    #allocation13 [shape = 's32[1]{0}', space=sflag, size = 0x4, scoped, tag = 'scoped memory for tpu_custom_call.1']
    #allocation14 [shape = 'u8[512]{0}', space=vmem, size = 0x400, scoped, tag = 'input window, operand 9, single buffered']
    #allocation15 [shape = 'u8[8192]{0}', space=vmem, size = 0x2000, scoped, tag = 'input window, operand 11, single buffered']
    #allocation16 [shape = 's32[1]{0}', space=sflag, size = 0x4, scoped, tag = 'scoped memory for tpu_custom_call.1']
    #allocation17 [shape = 'u8[16384]{0}', space=vmem, size = 0x4000, scoped, tag = 'output window, operand 0, single buffered']
    #allocation18 [shape = 'u8[16384]{0}', space=vmem, size = 0x4000, scoped, tag = 'output window, operand 1, single buffered']
    #allocation19 [shape = 's32[1]{0}', space=sflag, size = 0x4, scoped, tag = 'scoped memory for tpu_custom_call.1']
    %20 = vsyncpa [#allocation7], 0
    %21 = vsyncpa [#allocation5], 0
    %22 = vsyncpa [#allocation10], 0
    %23 = vsyncpa [#allocation13], 0
    %24 = vsyncpa [#allocation16], 0
    %25 = vsyncpa [#allocation6], 0
    %26 = vsyncpa [#allocation19], 0
    // Predicated region
    $region2: #{tpu_custom_call.1} parent=1 // pred_check
      _
    $region3: #{tpu_custom_call.1} parent=1 // pred_check_branch
      %28 = sbr.rel (0) target = $region5
    $region4: #{tpu_custom_call.1} parent=1 // pred_region
      %30 = vsyncadd [#allocation7], 0
      %s32 = sshll.u32 %s0, 4
      %s33 = int_to_ptr.vmem [resolvable:$true] %s32
      %35 = dma.vmem_to_smem %s33, 16, [#allocation4], [#allocation7]
    $region5: #{tpu_custom_call.1} parent=1 // pred_fallthru
      _
    // Predicated region
    $region6: #{tpu_custom_call.1} parent=1 // pred_check
      _
    $region7: #{tpu_custom_call.1} parent=1 // pred_check_branch
      %37 = sbr.rel (0) target = $region9
    $region8: #{tpu_custom_call.1} parent=1 // pred_region
      _
    $region9: #{tpu_custom_call.1} parent=1 // pred_fallthru
      _
    // Predicated region
    $region10: #{tpu_custom_call.1} parent=1 // pred_check
      _
    $region11: #{tpu_custom_call.1} parent=1 // pred_check_branch
      %39 = sbr.rel (0) target = $region13
    $region12: #{tpu_custom_call.1} parent=1 // pred_region
      _
    $region13: #{tpu_custom_call.1} parent=1 // pred_fallthru
      _
    // Predicated region
    $region14: #{tpu_custom_call.1} parent=1 // pred_check
      _
    $region15: #{tpu_custom_call.1} parent=1 // pred_check_branch
      %41 = sbr.rel (0) target = $region17
    $region16: #{tpu_custom_call.1} parent=1 // pred_region
      _
    $region17: #{tpu_custom_call.1} parent=1 // pred_fallthru
      _
    // Predicated region
    $region18: #{tpu_custom_call.1} parent=1 // pred_check
      _
    $region19: #{tpu_custom_call.1} parent=1 // pred_check_branch
      %43 = sbr.rel (0) target = $region21
    $region20: #{tpu_custom_call.1} parent=1 // pred_region
      _
    $region21: #{tpu_custom_call.1} parent=1 // pred_fallthru
      _
    // Predicated region
    $region22: #{tpu_custom_call.1} parent=1 // pred_check
      _
    $region23: #{tpu_custom_call.1} parent=1 // pred_check_branch
      %45 = sbr.rel (0) target = $region25
    $region24: #{tpu_custom_call.1} parent=1 // pred_region
      %47 = vsyncadd [#allocation5], 0
      %s49 = sshll.u32 %s5, 4
      %s50 = int_to_ptr.hbm [resolvable:$true] %s49
      %s51 = sshll.u32 [#allocation8], 4
      %s52 = int_to_ptr.vmem [resolvable:$true] %s51
      %54 = dma.hbm_to_vmem [thread:$0]  %s50, 16, %s52, [#allocation5]
    $region25: #{tpu_custom_call.1} parent=1 // pred_fallthru
      _
    // Predicated region
    $region26: #{tpu_custom_call.1} parent=1 // pred_check
      _
    $region27: #{tpu_custom_call.1} parent=1 // pred_check_branch
      %56 = sbr.rel (0) target = $region29
    $region28: #{tpu_custom_call.1} parent=1 // pred_region
      %58 = vsyncadd [#allocation10], 0
      %s60 = sshll.u32 %s6, 4
      %s61 = int_to_ptr.hbm [resolvable:$true] %s60
      %s62 = sshll.u32 [#allocation9], 4
      %s63 = int_to_ptr.vmem [resolvable:$true] %s62
      %65 = dma.hbm_to_vmem [thread:$0]  %s61, 16, %s63, [#allocation10]
    $region29: #{tpu_custom_call.1} parent=1 // pred_fallthru
      _
    // Predicated region
    $region30: #{tpu_custom_call.1} parent=1 // pred_check
      _
    $region31: #{tpu_custom_call.1} parent=1 // pred_check_branch
      %67 = sbr.rel (0) target = $region33
    $region32: #{tpu_custom_call.1} parent=1 // pred_region
      %69 = vsyncadd [#allocation10], 0
      %s70 = sshll.u32 %s7, 4
      %s71 = int_to_ptr.hbm [resolvable:$true] %s70
      %s72 = sshll.u32 [#allocation11], 4
      %s73 = int_to_ptr.vmem [resolvable:$true] %s72
      %78 = dma.hbm_to_vmem [thread:$0]  %s71, 256, %s73, [#allocation10], 64, 64, 4
    $region33: #{tpu_custom_call.1} parent=1 // pred_fallthru
      _
    // Predicated region
    $region34: #{tpu_custom_call.1} parent=1 // pred_check
      _
    $region35: #{tpu_custom_call.1} parent=1 // pred_check_branch
      %80 = sbr.rel (0) target = $region37
    $region36: #{tpu_custom_call.1} parent=1 // pred_region
      %82 = vsyncadd [#allocation13], 0
      %s83 = sshll.u32 %s8, 4
      %s84 = int_to_ptr.hbm [resolvable:$true] %s83
      %s85 = sshll.u32 [#allocation12], 4
      %s86 = int_to_ptr.vmem [resolvable:$true] %s85
      %91 = dma.hbm_to_vmem [thread:$0]  %s84, 256, %s86, [#allocation13], 64, 64, 4
    $region37: #{tpu_custom_call.1} parent=1 // pred_fallthru
      _
    // Predicated region
    $region38: #{tpu_custom_call.1} parent=1 // pred_check
      _
    $region39: #{tpu_custom_call.1} parent=1 // pred_check_branch
      %93 = sbr.rel (0) target = $region41
    $region40: #{tpu_custom_call.1} parent=1 // pred_region
      %95 = vsyncadd [#allocation13], 0
      %s97 = sshll.u32 %s9, 4
      %s98 = int_to_ptr.hbm [resolvable:$true] %s97
      %s99 = sshll.u32 [#allocation14], 4
      %s100 = int_to_ptr.vmem [resolvable:$true] %s99
      %102 = dma.hbm_to_vmem [thread:$0]  %s98, 16, %s100, [#allocation13]
    $region41: #{tpu_custom_call.1} parent=1 // pred_fallthru
      _
    // Predicated region
    $region42: #{tpu_custom_call.1} parent=1 // pred_check
      _
    $region43: #{tpu_custom_call.1} parent=1 // pred_check_branch
      %104 = sbr.rel (0) target = $region45
    $region44: #{tpu_custom_call.1} parent=1 // pred_region
      _
    $region45: #{tpu_custom_call.1} parent=1 // pred_fallthru
      _
    // Predicated region
    $region46: #{tpu_custom_call.1} parent=1 // pred_check
      _
    $region47: #{tpu_custom_call.1} parent=1 // pred_check_branch
      %106 = sbr.rel (0) target = $region49
    $region48: #{tpu_custom_call.1} parent=1 // pred_region
      %108 = vsyncadd [#allocation16], 0
      %s109 = sshll.u32 %s11, 4
      %s110 = int_to_ptr.hbm [resolvable:$true] %s109
      %s111 = sshll.u32 [#allocation15], 4
      %s112 = int_to_ptr.vmem [resolvable:$true] %s111
      %117 = dma.hbm_to_vmem [thread:$0]  %s110, 256, %s112, [#allocation16], 64, 64, 4
    $region49: #{tpu_custom_call.1} parent=1 // pred_fallthru
      _
    // Predicated region
    $region50: #{tpu_custom_call.1} parent=1 // pred_check
      _
    $region51: #{tpu_custom_call.1} parent=1 // pred_check_branch
      %119 = sbr.rel (0) target = $region53
    $region52: #{tpu_custom_call.1} parent=1 // pred_region
      _
    $region53: #{tpu_custom_call.1} parent=1 // pred_fallthru
      _
    // Predicated region
    $region54: #{tpu_custom_call.1} parent=1 // pred_check
      _
    $region55: #{tpu_custom_call.1} parent=1 // pred_check_branch
      %121 = sbr.rel (0) target = $region57
    $region56: #{tpu_custom_call.1} parent=1 // pred_region
      %123 = dma.done [#allocation7], 16
    $region57: #{tpu_custom_call.1} parent=1 // pred_fallthru
      _
    // Predicated region
    $region58: #{tpu_custom_call.1} parent=1 // pred_check
      _
    $region59: #{tpu_custom_call.1} parent=1 // pred_check_branch
      %125 = sbr.rel (0) target = $region61
    $region60: #{tpu_custom_call.1} parent=1 // pred_region
      %127 = dma.done [#allocation5], 16
    $region61: #{tpu_custom_call.1} parent=1 // pred_fallthru
      _
    // Predicated region
    $region62: #{tpu_custom_call.1} parent=1 // pred_check
      _
    $region63: #{tpu_custom_call.1} parent=1 // pred_check_branch
      %129 = sbr.rel (0) target = $region65
    $region64: #{tpu_custom_call.1} parent=1 // pred_region
      %131 = dma.done [#allocation10], 16
    $region65: #{tpu_custom_call.1} parent=1 // pred_fallthru
      _
    // Predicated region
    $region66: #{tpu_custom_call.1} parent=1 // pred_check
      _
    $region67: #{tpu_custom_call.1} parent=1 // pred_check_branch
      %133 = sbr.rel (0) target = $region69
    $region68: #{tpu_custom_call.1} parent=1 // pred_region
      %135 = dma.done [#allocation10], 256
    $region69: #{tpu_custom_call.1} parent=1 // pred_fallthru
      _
    // Predicated region
    $region70: #{tpu_custom_call.1} parent=1 // pred_check
      _
    $region71: #{tpu_custom_call.1} parent=1 // pred_check_branch
      %137 = sbr.rel (0) target = $region73
    $region72: #{tpu_custom_call.1} parent=1 // pred_region
      %139 = dma.done [#allocation13], 256
    $region73: #{tpu_custom_call.1} parent=1 // pred_fallthru
      _
    // Predicated region
    $region74: #{tpu_custom_call.1} parent=1 // pred_check
      _
    $region75: #{tpu_custom_call.1} parent=1 // pred_check_branch
      %141 = sbr.rel (0) target = $region77
    $region76: #{tpu_custom_call.1} parent=1 // pred_region
      %143 = dma.done [#allocation13], 16
    $region77: #{tpu_custom_call.1} parent=1 // pred_fallthru
      _
    // Predicated region
    $region78: #{tpu_custom_call.1} parent=1 // pred_check
      _
    $region79: #{tpu_custom_call.1} parent=1 // pred_check_branch
      %145 = sbr.rel (0) target = $region81
    $region80: #{tpu_custom_call.1} parent=1 // pred_region
      %147 = dma.done [#allocation16], 256
    $region81: #{tpu_custom_call.1} parent=1 // pred_fallthru
      _
    %148 = sfence
    %v150 = vld [vmem:[#allocation8] sm:$0x1]
    %v151 = vld [vmem:[#allocation9] sm:$0x1]
    %v152 = vld [vmem:[%s1] sm:$0xff]
    %v153 = vld [vmem:[%s1 + $0x8] sm:$0xff]
    %v154 = vld [vmem:[%s1 + $0x10] sm:$0xff]
    %v155 = vld [vmem:[%s1 + $0x18] sm:$0xff]
    %v156 = vld [vmem:[%s1 + $0x20] sm:$0xff]
    %v157 = vld [vmem:[%s1 + $0x28] sm:$0xff]
    %v158 = vld [vmem:[%s1 + $0x30] sm:$0xff]
    %v159 = vld [vmem:[%s1 + $0x38] sm:$0xff]
    %vm160 = vcmask 261120
    %v161 = vsel %vm160, %v152, 0.0
    %162 = vadd.xlane.f32.xlu0 %v161
    %v163 = vpop.xlane.xlu0 %162
    %v164 = vsel %vm160, %v153, 0.0
    %165 = vadd.xlane.f32.xlu0 %v164
    %v166 = vpop.xlane.xlu0 %165
    %v167 = vsel %vm160, %v154, 0.0
    %168 = vadd.xlane.f32.xlu0 %v167
    %v169 = vpop.xlane.xlu0 %168
    %v170 = vsel %vm160, %v155, 0.0
    %171 = vadd.xlane.f32.xlu0 %v170
    %v172 = vpop.xlane.xlu0 %171
    %v173 = vsel %vm160, %v156, 0.0
    %174 = vadd.xlane.f32.xlu0 %v173
    %v175 = vpop.xlane.xlu0 %174
    %v176 = vsel %vm160, %v157, 0.0
    %177 = vadd.xlane.f32.xlu0 %v176
    %v178 = vpop.xlane.xlu0 %177
    %v179 = vsel %vm160, %v158, 0.0
    %180 = vadd.xlane.f32.xlu0 %v179
    %v181 = vpop.xlane.xlu0 %180
    %v182 = vsel %vm160, %v159, 0.0
    %183 = vadd.xlane.f32.xlu0 %v182
    %v184 = vpop.xlane.xlu0 %183
    %v185 = vrcp.pop 32.0
    %v186 = vmul.f32 32.0, %v185
    %v187 = vsub.f32 1.0, %v186
    %v188 = vmul.f32 %v185, %v187
    %v189 = vadd.f32 %v185, %v188
    %vm190 = vweird.f32 %v185
    %v191 = vsel %vm190, %v185, %v189
    %v192 = vmul.f32 %v163, %v191
    %v193 = vmul.f32 %v166, %v191
    %v194 = vmul.f32 %v169, %v191
    %v195 = vmul.f32 %v172, %v191
    %v196 = vmul.f32 %v175, %v191
    %v197 = vmul.f32 %v178, %v191
    %v198 = vmul.f32 %v181, %v191
    %v199 = vmul.f32 %v184, %v191
    %v200 = vsub.f32 %v152, %v192
    %v201 = vsub.f32 %v153, %v193
    %v202 = vsub.f32 %v154, %v194
    %v203 = vsub.f32 %v155, %v195
    %v204 = vsub.f32 %v156, %v196
    %v205 = vsub.f32 %v157, %v197
    %v206 = vsub.f32 %v158, %v198
    %v207 = vsub.f32 %v159, %v199
    %v208 = vmul.f32 %v200, %v200
    %v209 = vmul.f32 %v201, %v201
    %v210 = vmul.f32 %v202, %v202
    %v211 = vmul.f32 %v203, %v203
    %v212 = vmul.f32 %v204, %v204
    %v213 = vmul.f32 %v205, %v205
    %v214 = vmul.f32 %v206, %v206
    %v215 = vmul.f32 %v207, %v207
    %v216 = vsel %vm160, %v208, 0.0
    %217 = vadd.xlane.f32.xlu0 %v216
    %v218 = vpop.xlane.xlu0 %217
    %v219 = vsel %vm160, %v209, 0.0
    %220 = vadd.xlane.f32.xlu0 %v219
    %v221 = vpop.xlane.xlu0 %220
    %v222 = vsel %vm160, %v210, 0.0
    %223 = vadd.xlane.f32.xlu0 %v222
    %v224 = vpop.xlane.xlu0 %223
    %v225 = vsel %vm160, %v211, 0.0
    %226 = vadd.xlane.f32.xlu0 %v225
    %v227 = vpop.xlane.xlu0 %226
    %v228 = vsel %vm160, %v212, 0.0
    %229 = vadd.xlane.f32.xlu0 %v228
    %v230 = vpop.xlane.xlu0 %229
    %v231 = vsel %vm160, %v213, 0.0
    %232 = vadd.xlane.f32.xlu0 %v231
    %v233 = vpop.xlane.xlu0 %232
    %v234 = vsel %vm160, %v214, 0.0
    %235 = vadd.xlane.f32.xlu0 %v234
    %v236 = vpop.xlane.xlu0 %235
    %v237 = vsel %vm160, %v215, 0.0
    %238 = vadd.xlane.f32.xlu0 %v237
    %v239 = vpop.xlane.xlu0 %238
    %v240 = vmul.f32 %v218, %v191
    %v241 = vmul.f32 %v221, %v191
    %v242 = vmul.f32 %v224, %v191
    %v243 = vmul.f32 %v227, %v191
    %v244 = vmul.f32 %v230, %v191
    %v245 = vmul.f32 %v233, %v191
    %v246 = vmul.f32 %v236, %v191
    %v247 = vmul.f32 %v239, %v191
    %v248 = vadd.f32 %v240, 1e-05
    %v249 = vadd.f32 %v241, 1e-05
    %v250 = vadd.f32 %v242, 1e-05
    %v251 = vadd.f32 %v243, 1e-05
    %v252 = vadd.f32 %v244, 1e-05
    %v253 = vadd.f32 %v245, 1e-05
    %v254 = vadd.f32 %v246, 1e-05
    %v255 = vadd.f32 %v247, 1e-05
    %v256 = vrsqrt.pop %v248
    %v257 = vmul.f32 %v256, %v248
    %v258 = vmul.f32 %v257, %v256
    %v259 = vmul.f32 0.5, %v258
    %v260 = vsub.f32 1.5, %v259
    %v261 = vmul.f32 %v256, %v260
    %vm262 = vweird.f32 %v248
    %vm263 = vweird.f32 %v256
    %vm264 = vmor %vm262, %vm263
    %v265 = vsel %vm264, %v256, %v261
    %v266 = vrsqrt.pop %v249
    %v267 = vmul.f32 %v266, %v249
    %v268 = vmul.f32 %v267, %v266
    %v269 = vmul.f32 0.5, %v268
    %v270 = vsub.f32 1.5, %v269
    %v271 = vmul.f32 %v266, %v270
    %vm272 = vweird.f32 %v249
    %vm273 = vweird.f32 %v266
    %vm274 = vmor %vm272, %vm273
    %v275 = vsel %vm274, %v266, %v271
    %v276 = vrsqrt.pop %v250
    %v277 = vmul.f32 %v276, %v250
    %v278 = vmul.f32 %v277, %v276
    %v279 = vmul.f32 0.5, %v278
    %v280 = vsub.f32 1.5, %v279
    %v281 = vmul.f32 %v276, %v280
    %vm282 = vweird.f32 %v250
    %vm283 = vweird.f32 %v276
    %vm284 = vmor %vm282, %vm283
    %v285 = vsel %vm284, %v276, %v281
    %v286 = vrsqrt.pop %v251
    %v287 = vmul.f32 %v286, %v251
    %v288 = vmul.f32 %v287, %v286
    %v289 = vmul.f32 0.5, %v288
    %v290 = vsub.f32 1.5, %v289
    %v291 = vmul.f32 %v286, %v290
    %vm292 = vweird.f32 %v251
    %vm293 = vweird.f32 %v286
    %vm294 = vmor %vm292, %vm293
    %v295 = vsel %vm294, %v286, %v291
    %v296 = vrsqrt.pop %v252
    %v297 = vmul.f32 %v296, %v252
    %v298 = vmul.f32 %v297, %v296
    %v299 = vmul.f32 0.5, %v298
    %v300 = vsub.f32 1.5, %v299
    %v301 = vmul.f32 %v296, %v300
    %vm302 = vweird.f32 %v252
    %vm303 = vweird.f32 %v296
    %vm304 = vmor %vm302, %vm303
    %v305 = vsel %vm304, %v296, %v301
    %v306 = vrsqrt.pop %v253
    %v307 = vmul.f32 %v306, %v253
    %v308 = vmul.f32 %v307, %v306
    %v309 = vmul.f32 0.5, %v308
    %v310 = vsub.f32 1.5, %v309
    %v311 = vmul.f32 %v306, %v310
    %vm312 = vweird.f32 %v253
    %vm313 = vweird.f32 %v306
    %vm314 = vmor %vm312, %vm313
    %v315 = vsel %vm314, %v306, %v311
    %v316 = vrsqrt.pop %v254
    %v317 = vmul.f32 %v316, %v254
    %v318 = vmul.f32 %v317, %v316
    %v319 = vmul.f32 0.5, %v318
    %v320 = vsub.f32 1.5, %v319
    %v321 = vmul.f32 %v316, %v320
    %vm322 = vweird.f32 %v254
    %vm323 = vweird.f32 %v316
    %vm324 = vmor %vm322, %vm323
    %v325 = vsel %vm324, %v316, %v321
    %v326 = vrsqrt.pop %v255
    %v327 = vmul.f32 %v326, %v255
    %v328 = vmul.f32 %v327, %v326
    %v329 = vmul.f32 0.5, %v328
    %v330 = vsub.f32 1.5, %v329
    %v331 = vmul.f32 %v326, %v330
    %vm332 = vweird.f32 %v255
    %vm333 = vweird.f32 %v326
    %vm334 = vmor %vm332, %vm333
    %v335 = vsel %vm334, %v326, %v331
    %v336 = vmul.f32 %v200, %v265
    %v337 = vmul.f32 %v201, %v275
    %v338 = vmul.f32 %v202, %v285
    %v339 = vmul.f32 %v203, %v295
    %v340 = vmul.f32 %v204, %v305
    %v341 = vmul.f32 %v205, %v315
    %v342 = vmul.f32 %v206, %v325
    %v343 = vmul.f32 %v207, %v335
    %v345 = vperm.slane %v150, 0
    %v347 = vmul.f32 %v336, %v345
    %v348 = vmul.f32 %v337, %v345
    %v349 = vmul.f32 %v338, %v345
    %v350 = vmul.f32 %v339, %v345
    %v351 = vmul.f32 %v340, %v345
    %v352 = vmul.f32 %v341, %v345
    %v353 = vmul.f32 %v342, %v345
    %v354 = vmul.f32 %v343, %v345
    %v356 = vperm.slane %v151, 0
    %v358 = vadd.f32 %v347, %v356
    %v359 = vadd.f32 %v348, %v356
    %v360 = vadd.f32 %v349, %v356
    %v361 = vadd.f32 %v350, %v356
    %v362 = vadd.f32 %v351, %v356
    %v363 = vadd.f32 %v352, %v356
    %v364 = vadd.f32 %v353, %v356
    %v365 = vadd.f32 %v354, %v356
    %v366 = vpack.c.bf16 %v359, %v358
    %v367 = vpack.c.bf16 %v361, %v360
    %v368 = vpack.c.bf16 %v363, %v362
    %v369 = vpack.c.bf16 %v365, %v364
    %v370 = vld [vmem:[#allocation11] sm:$0xf]
    %v371 = vld [vmem:[#allocation11 + $0x4] sm:$0xf]
    %v372 = vld [vmem:[#allocation11 + $0x8] sm:$0xf]
    %v373 = vld [vmem:[#allocation11 + $0xc] sm:$0xf]
    %v374 = vld [vmem:[#allocation14] sm:$0x1]
    %v376 = vperm.slane %v374, 0
    %v382 = vunpack.c.l.b16 %v370
    %v383 = vunpack.c.l.b16 %v371
    %v384 = vunpack.c.l.b16 %v372
    %v385 = vunpack.c.l.b16 %v373
    %v386 = vpack.c.b16 %v383, %v382
    %v387 = vpack.c.b16 %v385, %v384
    %v391 = vsel %vm160, %v366, 0
    %v394 = vsel %vm160, %v367, 0
    %v397 = vsel %vm160, %v368, 0
    %v400 = vsel %vm160, %v369, 0
    %402 = vmatpush.bf16.msra.mxu0 0
    %403 = vmatpush.bf16.msra.mxu0 0
    %404 = vmatpush.bf16.msra.mxu0 0
    %405 = vmatpush.bf16.msra.mxu0 0
    %406 = vmatpush.bf16.msra.mxu0 0
    %407 = vmatpush.bf16.msra.mxu0 0
    %408 = vmatpush.bf16.msra.mxu0 %v387
    %409 = vmatpush.bf16.msra.mxu0 %v386
    %410 = vmatmul.bf16.gmra.mxu0 %v391
    %v411 = vpop.f32.mrf.mxu0
    %v412 = vadd.f32 %v376, %v411
    %v413 = vpop.f32.mrf.mxu0
    %v414 = vadd.f32 %v376, %v413
    %415 = vmatmul.bf16.gmra.mxu0 %v394
    %v416 = vpop.f32.mrf.mxu0
    %v417 = vadd.f32 %v376, %v416
    %v418 = vpop.f32.mrf.mxu0
    %v419 = vadd.f32 %v376, %v418
    %420 = vmatmul.bf16.gmra.mxu0 %v397
    %v421 = vpop.f32.mrf.mxu0
    %v422 = vadd.f32 %v376, %v421
    %v423 = vpop.f32.mrf.mxu0
    %v424 = vadd.f32 %v376, %v423
    %425 = vmatmul.bf16.gmra.mxu0 %v400
    %v426 = vpop.f32.mrf.mxu0
    %v427 = vadd.f32 %v376, %v426
    %v428 = vpop.f32.mrf.mxu0
    %v429 = vadd.f32 %v376, %v428
    %430 = vdwg.mxu0
    %431 = vst [vmem:[#allocation2] sm:$0xff] %v412
    %432 = vst [vmem:[#allocation2 + $0x8] sm:$0xff] %v414
    %433 = vst [vmem:[#allocation2 + $0x10] sm:$0xff] %v417
    %434 = vst [vmem:[#allocation2 + $0x18] sm:$0xff] %v419
    %435 = vst [vmem:[#allocation2 + $0x20] sm:$0xff] %v422
    %436 = vst [vmem:[#allocation2 + $0x28] sm:$0xff] %v424
    %437 = vst [vmem:[#allocation2 + $0x30] sm:$0xff] %v427
    %438 = vst [vmem:[#allocation2 + $0x38] sm:$0xff] %v429
    %v439 = vld [vmem:[%s2] sm:$0xff]
    %v440 = vld [vmem:[%s2 + $0x8] sm:$0xff]
    %v441 = vld [vmem:[%s2 + $0x10] sm:$0xff]
    %v442 = vld [vmem:[%s2 + $0x18] sm:$0xff]
    %v443 = vld [vmem:[%s2 + $0x20] sm:$0xff]
    %v444 = vld [vmem:[%s2 + $0x28] sm:$0xff]
    %v445 = vld [vmem:[%s2 + $0x30] sm:$0xff]
    %v446 = vld [vmem:[%s2 + $0x38] sm:$0xff]
    %v447 = vsel %vm160, %v439, 0.0
    %448 = vadd.xlane.f32.xlu0 %v447
    %v449 = vpop.xlane.xlu0 %448
    %v450 = vsel %vm160, %v440, 0.0
    %451 = vadd.xlane.f32.xlu0 %v450
    %v452 = vpop.xlane.xlu0 %451
    %v453 = vsel %vm160, %v441, 0.0
    %454 = vadd.xlane.f32.xlu0 %v453
    %v455 = vpop.xlane.xlu0 %454
    %v456 = vsel %vm160, %v442, 0.0
    %457 = vadd.xlane.f32.xlu0 %v456
    %v458 = vpop.xlane.xlu0 %457
    %v459 = vsel %vm160, %v443, 0.0
    %460 = vadd.xlane.f32.xlu0 %v459
    %v461 = vpop.xlane.xlu0 %460
    %v462 = vsel %vm160, %v444, 0.0
    %463 = vadd.xlane.f32.xlu0 %v462
    %v464 = vpop.xlane.xlu0 %463
    %v465 = vsel %vm160, %v445, 0.0
    %466 = vadd.xlane.f32.xlu0 %v465
    %v467 = vpop.xlane.xlu0 %466
    %v468 = vsel %vm160, %v446, 0.0
    %469 = vadd.xlane.f32.xlu0 %v468
    %v470 = vpop.xlane.xlu0 %469
    %v471 = vmul.f32 %v449, %v191
    %v472 = vmul.f32 %v452, %v191
    %v473 = vmul.f32 %v455, %v191
    %v474 = vmul.f32 %v458, %v191
    %v475 = vmul.f32 %v461, %v191
    %v476 = vmul.f32 %v464, %v191
    %v477 = vmul.f32 %v467, %v191
    %v478 = vmul.f32 %v470, %v191
    %v479 = vsub.f32 %v439, %v471
    %v480 = vsub.f32 %v440, %v472
    %v481 = vsub.f32 %v441, %v473
    %v482 = vsub.f32 %v442, %v474
    %v483 = vsub.f32 %v443, %v475
    %v484 = vsub.f32 %v444, %v476
    %v485 = vsub.f32 %v445, %v477
    %v486 = vsub.f32 %v446, %v478
    %v487 = vmul.f32 %v479, %v479
    %v488 = vmul.f32 %v480, %v480
    %v489 = vmul.f32 %v481, %v481
    %v490 = vmul.f32 %v482, %v482
    %v491 = vmul.f32 %v483, %v483
    %v492 = vmul.f32 %v484, %v484
    %v493 = vmul.f32 %v485, %v485
    %v494 = vmul.f32 %v486, %v486
    %v495 = vsel %vm160, %v487, 0.0
    %496 = vadd.xlane.f32.xlu0 %v495
    %v497 = vpop.xlane.xlu0 %496
    %v498 = vsel %vm160, %v488, 0.0
    %499 = vadd.xlane.f32.xlu0 %v498
    %v500 = vpop.xlane.xlu0 %499
    %v501 = vsel %vm160, %v489, 0.0
    %502 = vadd.xlane.f32.xlu0 %v501
    %v503 = vpop.xlane.xlu0 %502
    %v504 = vsel %vm160, %v490, 0.0
    %505 = vadd.xlane.f32.xlu0 %v504
    %v506 = vpop.xlane.xlu0 %505
    %v507 = vsel %vm160, %v491, 0.0
    %508 = vadd.xlane.f32.xlu0 %v507
    %v509 = vpop.xlane.xlu0 %508
    %v510 = vsel %vm160, %v492, 0.0
    %511 = vadd.xlane.f32.xlu0 %v510
    %v512 = vpop.xlane.xlu0 %511
    %v513 = vsel %vm160, %v493, 0.0
    %514 = vadd.xlane.f32.xlu0 %v513
    %v515 = vpop.xlane.xlu0 %514
    %v516 = vsel %vm160, %v494, 0.0
    %517 = vadd.xlane.f32.xlu0 %v516
    %v518 = vpop.xlane.xlu0 %517
    %v519 = vmul.f32 %v497, %v191
    %v520 = vmul.f32 %v500, %v191
    %v521 = vmul.f32 %v503, %v191
    %v522 = vmul.f32 %v506, %v191
    %v523 = vmul.f32 %v509, %v191
    %v524 = vmul.f32 %v512, %v191
    %v525 = vmul.f32 %v515, %v191
    %v526 = vmul.f32 %v518, %v191
    %v527 = vadd.f32 %v519, 1e-05
    %v528 = vadd.f32 %v520, 1e-05
    %v529 = vadd.f32 %v521, 1e-05
    %v530 = vadd.f32 %v522, 1e-05
    %v531 = vadd.f32 %v523, 1e-05
    %v532 = vadd.f32 %v524, 1e-05
    %v533 = vadd.f32 %v525, 1e-05
    %v534 = vadd.f32 %v526, 1e-05
    %v535 = vrsqrt.pop %v527
    %v536 = vmul.f32 %v535, %v527
    %v537 = vmul.f32 %v536, %v535
    %v538 = vmul.f32 0.5, %v537
    %v539 = vsub.f32 1.5, %v538
    %v540 = vmul.f32 %v535, %v539
    %vm541 = vweird.f32 %v527
    %vm542 = vweird.f32 %v535
    %vm543 = vmor %vm541, %vm542
    %v544 = vsel %vm543, %v535, %v540
    %v545 = vrsqrt.pop %v528
    %v546 = vmul.f32 %v545, %v528
    %v547 = vmul.f32 %v546, %v545
    %v548 = vmul.f32 0.5, %v547
    %v549 = vsub.f32 1.5, %v548
    %v550 = vmul.f32 %v545, %v549
    %vm551 = vweird.f32 %v528
    %vm552 = vweird.f32 %v545
    %vm553 = vmor %vm551, %vm552
    %v554 = vsel %vm553, %v545, %v550
    %v555 = vrsqrt.pop %v529
    %v556 = vmul.f32 %v555, %v529
    %v557 = vmul.f32 %v556, %v555
    %v558 = vmul.f32 0.5, %v557
    %v559 = vsub.f32 1.5, %v558
    %v560 = vmul.f32 %v555, %v559
    %vm561 = vweird.f32 %v529
    %vm562 = vweird.f32 %v555
    %vm563 = vmor %vm561, %vm562
    %v564 = vsel %vm563, %v555, %v560
    %v565 = vrsqrt.pop %v530
    %v566 = vmul.f32 %v565, %v530
    %v567 = vmul.f32 %v566, %v565
    %v568 = vmul.f32 0.5, %v567
    %v569 = vsub.f32 1.5, %v568
    %v570 = vmul.f32 %v565, %v569
    %vm571 = vweird.f32 %v530
    %vm572 = vweird.f32 %v565
    %vm573 = vmor %vm571, %vm572
    %v574 = vsel %vm573, %v565, %v570
    %v575 = vrsqrt.pop %v531
    %v576 = vmul.f32 %v575, %v531
    %v577 = vmul.f32 %v576, %v575
    %v578 = vmul.f32 0.5, %v577
    %v579 = vsub.f32 1.5, %v578
    %v580 = vmul.f32 %v575, %v579
    %vm581 = vweird.f32 %v531
    %vm582 = vweird.f32 %v575
    %vm583 = vmor %vm581, %vm582
    %v584 = vsel %vm583, %v575, %v580
    %v585 = vrsqrt.pop %v532
    %v586 = vmul.f32 %v585, %v532
    %v587 = vmul.f32 %v586, %v585
    %v588 = vmul.f32 0.5, %v587
    %v589 = vsub.f32 1.5, %v588
    %v590 = vmul.f32 %v585, %v589
    %vm591 = vweird.f32 %v532
    %vm592 = vweird.f32 %v585
    %vm593 = vmor %vm591, %vm592
    %v594 = vsel %vm593, %v585, %v590
    %v595 = vrsqrt.pop %v533
    %v596 = vmul.f32 %v595, %v533
    %v597 = vmul.f32 %v596, %v595
    %v598 = vmul.f32 0.5, %v597
    %v599 = vsub.f32 1.5, %v598
    %v600 = vmul.f32 %v595, %v599
    %vm601 = vweird.f32 %v533
    %vm602 = vweird.f32 %v595
    %vm603 = vmor %vm601, %vm602
    %v604 = vsel %vm603, %v595, %v600
    %v605 = vrsqrt.pop %v534
    %v606 = vmul.f32 %v605, %v534
    %v607 = vmul.f32 %v606, %v605
    %v608 = vmul.f32 0.5, %v607
    %v609 = vsub.f32 1.5, %v608
    %v610 = vmul.f32 %v605, %v609
    %vm611 = vweird.f32 %v534
    %vm612 = vweird.f32 %v605
    %vm613 = vmor %vm611, %vm612
    %v614 = vsel %vm613, %v605, %v610
    %v615 = vmul.f32 %v479, %v544
    %v616 = vmul.f32 %v480, %v554
    %v617 = vmul.f32 %v481, %v564
    %v618 = vmul.f32 %v482, %v574
    %v619 = vmul.f32 %v483, %v584
    %v620 = vmul.f32 %v484, %v594
    %v621 = vmul.f32 %v485, %v604
    %v622 = vmul.f32 %v486, %v614
    %v623 = vmul.f32 %v615, %v345
    %v624 = vmul.f32 %v616, %v345
    %v625 = vmul.f32 %v617, %v345
    %v626 = vmul.f32 %v618, %v345
    %v627 = vmul.f32 %v619, %v345
    %v628 = vmul.f32 %v620, %v345
    %v629 = vmul.f32 %v621, %v345
    %v630 = vmul.f32 %v622, %v345
    %v631 = vadd.f32 %v623, %v356
    %v632 = vadd.f32 %v624, %v356
    %v633 = vadd.f32 %v625, %v356
    %v634 = vadd.f32 %v626, %v356
    %v635 = vadd.f32 %v627, %v356
    %v636 = vadd.f32 %v628, %v356
    %v637 = vadd.f32 %v629, %v356
    %v638 = vadd.f32 %v630, %v356
    %v639 = vpack.c.bf16 %v632, %v631
    %v640 = vpack.c.bf16 %v634, %v633
    %v641 = vpack.c.bf16 %v636, %v635
    %v642 = vpack.c.bf16 %v638, %v637
    %v643 = vld [vmem:[%s10] sm:$0xf]
    %v644 = vld [vmem:[%s10 + $0x4] sm:$0xf]
    %v645 = vld [vmem:[%s10 + $0x8] sm:$0xf]
    %v646 = vld [vmem:[%s10 + $0xc] sm:$0xf]
    %v647 = vld [vmem:[%s12] sm:$0x1]
    %v649 = vperm.slane %v647, 0
    %v655 = vunpack.c.l.b16 %v643
    %v656 = vunpack.c.l.b16 %v644
    %v657 = vunpack.c.l.b16 %v645
    %v658 = vunpack.c.l.b16 %v646
    %v659 = vpack.c.b16 %v656, %v655
    %v660 = vpack.c.b16 %v658, %v657
    %v664 = vsel %vm160, %v639, 0
    %v667 = vsel %vm160, %v640, 0
    %v670 = vsel %vm160, %v641, 0
    %v673 = vsel %vm160, %v642, 0
    %675 = vmatpush.bf16.msra.mxu0 0
    %676 = vmatpush.bf16.msra.mxu0 0
    %677 = vmatpush.bf16.msra.mxu0 0
    %678 = vmatpush.bf16.msra.mxu0 0
    %679 = vmatpush.bf16.msra.mxu0 0
    %680 = vmatpush.bf16.msra.mxu0 0
    %681 = vmatpush.bf16.msra.mxu0 %v660
    %682 = vmatpush.bf16.msra.mxu0 %v659
    %683 = vmatmul.bf16.gmra.mxu0 %v664
    %v684 = vpop.f32.mrf.mxu0
    %v685 = vadd.f32 %v649, %v684
    %v686 = vpop.f32.mrf.mxu0
    %v687 = vadd.f32 %v649, %v686
    %688 = vmatmul.bf16.gmra.mxu0 %v667
    %v689 = vpop.f32.mrf.mxu0
    %v690 = vadd.f32 %v649, %v689
    %v691 = vpop.f32.mrf.mxu0
    %v692 = vadd.f32 %v649, %v691
    %693 = vmatmul.bf16.gmra.mxu0 %v670
    %v694 = vpop.f32.mrf.mxu0
    %v695 = vadd.f32 %v649, %v694
    %v696 = vpop.f32.mrf.mxu0
    %v697 = vadd.f32 %v649, %v696
    %698 = vmatmul.bf16.gmra.mxu0 %v673
    %v699 = vpop.f32.mrf.mxu0
    %v700 = vadd.f32 %v649, %v699
    %v701 = vpop.f32.mrf.mxu0
    %v702 = vadd.f32 %v649, %v701
    %703 = vdwg.mxu0
    %704 = vst [vmem:[#allocation3] sm:$0xff] %v685
    %705 = vst [vmem:[#allocation3 + $0x8] sm:$0xff] %v687
    %706 = vst [vmem:[#allocation3 + $0x10] sm:$0xff] %v690
    %707 = vst [vmem:[#allocation3 + $0x18] sm:$0xff] %v692
    %708 = vst [vmem:[#allocation3 + $0x20] sm:$0xff] %v695
    %709 = vst [vmem:[#allocation3 + $0x28] sm:$0xff] %v697
    %710 = vst [vmem:[#allocation3 + $0x30] sm:$0xff] %v700
    %711 = vst [vmem:[#allocation3 + $0x38] sm:$0xff] %v702
    %vm712 = vcmask 257024
    %713 = vst.msk [vmem:[#allocation17] sm:$0xf] %vm712, 0
    %714 = vst.msk [vmem:[#allocation17 + $0x4] sm:$0xf] %vm712, 0
    %715 = vst.msk [vmem:[#allocation17 + $0x8] sm:$0xf] %vm712, 0
    %716 = vst.msk [vmem:[#allocation17 + $0xc] sm:$0xf] %vm712, 0
    %717 = vst.msk [vmem:[#allocation17 + $0x10] sm:$0xf] %vm712, 0
    %718 = vst.msk [vmem:[#allocation17 + $0x14] sm:$0xf] %vm712, 0
    %719 = vst.msk [vmem:[#allocation17 + $0x18] sm:$0xf] %vm712, 0
    %720 = vst.msk [vmem:[#allocation17 + $0x1c] sm:$0xf] %vm712, 0
    %721 = vst.msk [vmem:[#allocation18] sm:$0xf] %vm712, 0
    %722 = vst.msk [vmem:[#allocation18 + $0x4] sm:$0xf] %vm712, 0
    %723 = vst.msk [vmem:[#allocation18 + $0x8] sm:$0xf] %vm712, 0
    %724 = vst.msk [vmem:[#allocation18 + $0xc] sm:$0xf] %vm712, 0
    %725 = vst.msk [vmem:[#allocation18 + $0x10] sm:$0xf] %vm712, 0
    %726 = vst.msk [vmem:[#allocation18 + $0x14] sm:$0xf] %vm712, 0
    %727 = vst.msk [vmem:[#allocation18 + $0x18] sm:$0xf] %vm712, 0
    %728 = vst.msk [vmem:[#allocation18 + $0x1c] sm:$0xf] %vm712, 0
    %s729 = sld [smem:[#allocation4]]
    %v730 = vld [vmem:[#allocation12] sm:$0xf]
    %v731 = vld [vmem:[#allocation12 + $0x4] sm:$0xf]
    %v732 = vld [vmem:[#allocation12 + $0x8] sm:$0xf]
    %v733 = vld [vmem:[#allocation12 + $0xc] sm:$0xf]
    // While loop
    $region82: #{tpu_custom_call.1} parent=1 // loop_pre_header
      _
    $region83: #{tpu_custom_call.1} parent=1 // loop_header
      %s735 = sphi 0, %s737
      %p736 = scmp.ge.s32.totalorder %s735, %s729
      %v740 = vphi 0.0, %v833
      %v741 = vphi 0.0, %v836
    $region84: #{tpu_custom_call.1} parent=1 // loop_header_branch
      %739 = sbr.rel (%p736) target = $region88
    $region85: #{tpu_custom_call.1} parent=1 // loop_body
      %s742 = smul.u32 %s735, 8
      %s743 = scalar_lea.vmem [#allocation2], %s742
      %v744 = vld [vmem:[%s743] sm:$0xff]
      %v745 = vpack.c.bf16 %v740, %v740
      %747 = vrot.lane.b32.xlu0 %v745, 64
      %v748 = vpop.permute.xlu0 %747
      %v753 = vunpack.c.l.b16 %v730
      %v754 = vunpack.c.l.b16 %v731
      %v755 = vunpack.c.l.b16 %v732
      %v756 = vunpack.c.l.b16 %v733
      %v757 = vpack.c.b16 %v754, %v753
      %v758 = vpack.c.b16 %v756, %v755
      %v762 = vsel %vm160, %v748, 0
      %764 = vmatpush.bf16.msra.mxu0 0
      %765 = vmatpush.bf16.msra.mxu0 0
      %766 = vmatpush.bf16.msra.mxu0 0
      %767 = vmatpush.bf16.msra.mxu0 0
      %768 = vmatpush.bf16.msra.mxu0 0
      %769 = vmatpush.bf16.msra.mxu0 0
      %770 = vmatpush.bf16.msra.mxu0 %v758
      %771 = vmatpush.bf16.msra.mxu0 %v757
      %772 = vmatmul.bf16.gmra.mxu0 %v762
      %v773 = vpop.f32.mrf.mxu0
      %v774 = vadd.f32 0.0, %v773
      %v775 = vpop.f32.mrf.mxu0
      %776 = vdwg.mxu0
      %v777 = vadd.f32 %v744, %v774
      %v778 = vxor.u32 %v777, 2147483648
      %v779 = vmul.f32 %v778, 1.442695
      %v780 = vpow.pop %v779
      %v781 = vadd.f32 %v780, 1.0
      %v782 = vrcp.pop %v781
      %v783 = vmul.f32 %v781, %v782
      %v784 = vsub.f32 1.0, %v783
      %v785 = vmul.f32 %v782, %v784
      %v786 = vadd.f32 %v782, %v785
      %vm787 = vweird.f32 %v781
      %vm788 = vweird.f32 %v782
      %vm789 = vmor %vm787, %vm788
      %v790 = vsel %vm789, %v782, %v786
      %v791 = vand.u32 2147483647, %v781
      %vm792 = vcmp.eq.f32.partialorder %v791, 8.507059e+37
      %v793 = vand.u32 %v781, 2147483648
      %v794 = vor.u32 1.1754944e-38, %v793
      %v795 = vsel %vm792, %v794, %v790
      %v796 = vmul.f32 1.0, %v795
      %v797 = vtanh.pop %v777
      %v798 = vmul.f32 %v796, %v741
      %800 = vrot.lane.b32.xlu0 %v797, 32
      %v801 = vpop.permute.xlu0 %800
      %v803 = vmul.f32 %v796, %v801
      %805 = vrot.lane.b32.xlu0 %v803, 32
      %v806 = vpop.permute.xlu0 %805
      %v808 = vadd.f32 %v798, %v806
      %v809 = vtanh.pop %v808
      %811 = vrot.lane.b32.xlu0 %v809, 32
      %v812 = vpop.permute.xlu0 %811
      %v814 = vmul.f32 %v796, %v812
      %s815 = scalar_lea.vmem %s3, %s742
      %v816 = vld [vmem:[%s815] sm:$0xff]
      %818 = vset.pattern.permute.xlu0 0
      %819 = vperm.xlu0 %818, %v816
      %v820 = vpop.permute.xlu0 %819
      %v822 = vmul.f32 %v820, %v814
      %v823 = vpack.c.bf16 %v822, %v822
      %825 = vrot.lane.b32.xlu0 %v823, 64
      %v826 = vpop.permute.xlu0 %825
      %s828 = smul.addr %s735, 4
      %s829 = scalar_lea.vmem [#allocation17], %s828
      %830 = vst.msk [vmem:[%s829] sm:$0xf] %vm712, %v826
      %v831 = vsub.f32 %v814, %v740
      %v832 = vmul.f32 %v820, %v831
      %v833 = vadd.f32 %v740, %v832
      %v834 = vsub.f32 %v808, %v741
      %v835 = vmul.f32 %v820, %v834
      %v836 = vadd.f32 %v741, %v835
    $region86: #{tpu_custom_call.1} parent=1 // loop_footer
      %s737 = sadd.s32 %s735, 1
    $region87: #{tpu_custom_call.1} parent=1 // loop_footer_branch
      %734 = sbr.rel target = $region83
    $region88: #{tpu_custom_call.1} parent=1 // loop_exit
      _
    %s837 = sld [smem:[#allocation4 + $0x1]]
    %v838 = vld [vmem:[#allocation15] sm:$0xf]
    %v839 = vld [vmem:[#allocation15 + $0x4] sm:$0xf]
    %v840 = vld [vmem:[#allocation15 + $0x8] sm:$0xf]
    %v841 = vld [vmem:[#allocation15 + $0xc] sm:$0xf]
    // While loop
    $region89: #{tpu_custom_call.1} parent=1 // loop_pre_header
      _
    $region90: #{tpu_custom_call.1} parent=1 // loop_header
      %s843 = sphi 0, %s845
      %p844 = scmp.ge.s32.totalorder %s843, %s837
      %v848 = vphi %v740, %v941
      %v849 = vphi %v741, %v944
    $region91: #{tpu_custom_call.1} parent=1 // loop_header_branch
      %847 = sbr.rel (%p844) target = $region95
    $region92: #{tpu_custom_call.1} parent=1 // loop_body
      %s850 = smul.u32 %s843, 8
      %s851 = scalar_lea.vmem [#allocation3], %s850
      %v852 = vld [vmem:[%s851] sm:$0xff]
      %v853 = vpack.c.bf16 %v848, %v848
      %855 = vrot.lane.b32.xlu0 %v853, 64
      %v856 = vpop.permute.xlu0 %855
      %v861 = vunpack.c.l.b16 %v838
      %v862 = vunpack.c.l.b16 %v839
      %v863 = vunpack.c.l.b16 %v840
      %v864 = vunpack.c.l.b16 %v841
      %v865 = vpack.c.b16 %v862, %v861
      %v866 = vpack.c.b16 %v864, %v863
      %v870 = vsel %vm160, %v856, 0
      %872 = vmatpush.bf16.msra.mxu0 0
      %873 = vmatpush.bf16.msra.mxu0 0
      %874 = vmatpush.bf16.msra.mxu0 0
      %875 = vmatpush.bf16.msra.mxu0 0
      %876 = vmatpush.bf16.msra.mxu0 0
      %877 = vmatpush.bf16.msra.mxu0 0
      %878 = vmatpush.bf16.msra.mxu0 %v866
      %879 = vmatpush.bf16.msra.mxu0 %v865
      %880 = vmatmul.bf16.gmra.mxu0 %v870
      %v881 = vpop.f32.mrf.mxu0
      %v882 = vadd.f32 0.0, %v881
      %v883 = vpop.f32.mrf.mxu0
      %884 = vdwg.mxu0
      %v885 = vadd.f32 %v852, %v882
      %v886 = vxor.u32 %v885, 2147483648
      %v887 = vmul.f32 %v886, 1.442695
      %v888 = vpow.pop %v887
      %v889 = vadd.f32 %v888, 1.0
      %v890 = vrcp.pop %v889
      %v891 = vmul.f32 %v889, %v890
      %v892 = vsub.f32 1.0, %v891
      %v893 = vmul.f32 %v890, %v892
      %v894 = vadd.f32 %v890, %v893
      %vm895 = vweird.f32 %v889
      %vm896 = vweird.f32 %v890
      %vm897 = vmor %vm895, %vm896
      %v898 = vsel %vm897, %v890, %v894
      %v899 = vand.u32 2147483647, %v889
      %vm900 = vcmp.eq.f32.partialorder %v899, 8.507059e+37
      %v901 = vand.u32 %v889, 2147483648
      %v902 = vor.u32 1.1754944e-38, %v901
      %v903 = vsel %vm900, %v902, %v898
      %v904 = vmul.f32 1.0, %v903
      %v905 = vtanh.pop %v885
      %v906 = vmul.f32 %v904, %v849
      %908 = vrot.lane.b32.xlu0 %v905, 32
      %v909 = vpop.permute.xlu0 %908
      %v911 = vmul.f32 %v904, %v909
      %913 = vrot.lane.b32.xlu0 %v911, 32
      %v914 = vpop.permute.xlu0 %913
      %v916 = vadd.f32 %v906, %v914
      %v917 = vtanh.pop %v916
      %919 = vrot.lane.b32.xlu0 %v917, 32
      %v920 = vpop.permute.xlu0 %919
      %v922 = vmul.f32 %v904, %v920
      %s923 = scalar_lea.vmem %s4, %s850
      %v924 = vld [vmem:[%s923] sm:$0xff]
      %926 = vset.pattern.permute.xlu0 0
      %927 = vperm.xlu0 %926, %v924
      %v928 = vpop.permute.xlu0 %927
      %v930 = vmul.f32 %v928, %v922
      %v931 = vpack.c.bf16 %v930, %v930
      %933 = vrot.lane.b32.xlu0 %v931, 64
      %v934 = vpop.permute.xlu0 %933
      %s936 = smul.addr %s843, 4
      %s937 = scalar_lea.vmem [#allocation18], %s936
      %938 = vst.msk [vmem:[%s937] sm:$0xf] %vm712, %v934
      %v939 = vsub.f32 %v922, %v848
      %v940 = vmul.f32 %v928, %v939
      %v941 = vadd.f32 %v848, %v940
      %v942 = vsub.f32 %v916, %v849
      %v943 = vmul.f32 %v928, %v942
      %v944 = vadd.f32 %v849, %v943
    $region93: #{tpu_custom_call.1} parent=1 // loop_footer
      %s845 = sadd.s32 %s843, 1
    $region94: #{tpu_custom_call.1} parent=1 // loop_footer_branch
      %842 = sbr.rel target = $region90
    $region95: #{tpu_custom_call.1} parent=1 // loop_exit
      _
    // Predicated region
    $region96: #{tpu_custom_call.1} parent=1 // pred_check
      _
    $region97: #{tpu_custom_call.1} parent=1 // pred_check_branch
      %946 = sbr.rel (0) target = $region99
    $region98: #{tpu_custom_call.1} parent=1 // pred_region
      %948 = vsyncadd [#allocation6], 0
      %s949 = sshll.u32 [#allocation17], 4
      %s950 = int_to_ptr.vmem [resolvable:$true] %s949
      %s951 = sshll.u32 %s13, 4
      %s952 = int_to_ptr.hbm [resolvable:$true] %s951
      %957 = dma.vmem_to_hbm [thread:$0]  %s950, 512, %s952, [#allocation6], 64, 64, 4
    $region99: #{tpu_custom_call.1} parent=1 // pred_fallthru
      _
    // Predicated region
    $region100: #{tpu_custom_call.1} parent=1 // pred_check
      _
    $region101: #{tpu_custom_call.1} parent=1 // pred_check_branch
      %959 = sbr.rel (0) target = $region103
    $region102: #{tpu_custom_call.1} parent=1 // pred_region
      %961 = vsyncadd [#allocation19], 0
      %s962 = sshll.u32 [#allocation18], 4
      %s963 = int_to_ptr.vmem [resolvable:$true] %s962
      %s964 = sshll.u32 %s14, 4
      %s965 = int_to_ptr.hbm [resolvable:$true] %s964
      %970 = dma.vmem_to_hbm [thread:$0]  %s963, 512, %s965, [#allocation19], 64, 64, 4
    $region103: #{tpu_custom_call.1} parent=1 // pred_fallthru
      _
    // Predicated region
    $region104: #{tpu_custom_call.1} parent=1 // pred_check
      _
    $region105: #{tpu_custom_call.1} parent=1 // pred_check_branch
      %972 = sbr.rel (0) target = $region107
    $region106: #{tpu_custom_call.1} parent=1 // pred_region
      %974 = dma.done [#allocation6], 512
    $region107: #{tpu_custom_call.1} parent=1 // pred_fallthru
      _
    // Predicated region
    $region108: #{tpu_custom_call.1} parent=1 // pred_check
      _
    $region109: #{tpu_custom_call.1} parent=1 // pred_check_branch
      %976 = sbr.rel (0) target = $region111
    $region110: #{tpu_custom_call.1} parent=1 // pred_region
      %978 = dma.done [#allocation19], 512
    $region111: #{tpu_custom_call.1} parent=1 // pred_fallthru
      _
    %979 = vsyncpa [#allocation5], 1
    %980 = vsyncpa [#allocation10], 1
    %981 = vsyncpa [#allocation13], 1
    %982 = vsyncpa [#allocation16], 1
    %983 = vsyncpa [#allocation6], 1
    %984 = vsyncpa [#allocation19], 1
    %985 = vsyncpa [#allocation7], 1

</llo_original>
